<compile_context>
chip_gen: v7x
topology: tpu7x:2x2x1
jax: 0.10.0
libtpu: 0.0.40
codegen_flags: <defaults>
</compile_context>

<pallas_src>
import functools
import numpy as np
import jax
import jax.numpy as jnp
from jax import lax
from jax.experimental import pallas as pl
from jax.experimental.pallas import tpu as pltpu

BN_EPS = 1e-5


def bottleneck_kernel(x_ref, xrows_hbm, w1_ref, b1_ref, w2_ref, b2_ref,
                      w3_ref, b3_ref, o_ref, halo_ref, h1pad_ref, sem,
                      *, TH, H, W, planes):
    """One (batch, row-tile) grid step.

    x_ref     : (1, TH, W, Cin) bf16   main rows (auto-pipelined block)
    xrows_hbm : (N*H, W, Cin)   bf16   whole input, memory_space=ANY (halo DMA)
    w1/w2/w3  : bf16 weights with BN scale folded; w2 is (9, planes, planes)
    b1/b2/b3  : (1, C) f32 folded BN biases
    o_ref     : (1, TH, W, Cout) bf16
    halo_ref  : (2, W, Cin)          bf16 VMEM   top / bottom halo rows
    h1pad_ref : (TH+2, W+2, planes)  bf16 VMEM   conv2 input, zero padded
    """
    Cin = x_ref.shape[-1]
    Cout = o_ref.shape[-1]
    HW = TH * W

    n = pl.program_id(0)
    t = pl.program_id(1)

    # ---- kick off halo-row DMAs (row index clamped at the image boundary;
    #      the clamped row's result is discarded by the zero-row writes below).
    top_src = n * H + jnp.maximum(t * TH - 1, 0)
    bot_src = n * H + jnp.minimum((t + 1) * TH, H - 1)
    ctop = pltpu.make_async_copy(xrows_hbm.at[pl.ds(top_src, 1)],
                                 halo_ref.at[pl.ds(0, 1)], sem.at[0])
    cbot = pltpu.make_async_copy(xrows_hbm.at[pl.ds(bot_src, 1)],
                                 halo_ref.at[pl.ds(1, 1)], sem.at[1])
    ctop.start()
    cbot.start()

    # ---- conv1 (1x1, BN1 folded) + ReLU on the main rows (overlaps the DMAs).
    xm = x_ref[0]                                             # (TH, W, Cin) bf16
    h1 = jnp.dot(xm.reshape(HW, Cin), w1_ref[...],
                 preferred_element_type=jnp.float32)
    h1 = jnp.maximum(h1 + b1_ref[...], 0.0)
    h1pad_ref[1:TH + 1, 1:W + 1, :] = (
        h1.reshape(TH, W, planes).astype(jnp.bfloat16))

    # Zero the left/right padding columns once per core: the scratch persists
    # across grid steps and no other write touches these columns.
    @pl.when(t == 0)
    def _():
        h1pad_ref[:, 0, :] = jnp.zeros((TH + 2, planes), jnp.bfloat16)
        h1pad_ref[:, W + 1, :] = jnp.zeros((TH + 2, planes), jnp.bfloat16)

    # ---- conv1 + ReLU on the two halo rows ----
    ctop.wait()
    cbot.wait()
    hh = jnp.dot(halo_ref[...].reshape(2 * W, Cin), w1_ref[...],
                 preferred_element_type=jnp.float32)
    hh = jnp.maximum(hh + b1_ref[...], 0.0)
    hh = hh.reshape(2, W, planes).astype(jnp.bfloat16)
    h1pad_ref[0, 1:W + 1, :] = hh[0]
    h1pad_ref[TH + 1, 1:W + 1, :] = hh[1]

    # Halo rows outside the image are the 3x3 conv's zero padding, not
    # relu(conv1(...)); overwrite them with zeros on the boundary tiles.
    @pl.when(t == 0)
    def _():
        h1pad_ref[0, :, :] = jnp.zeros((W + 2, planes), jnp.bfloat16)

    @pl.when(t == pl.num_programs(1) - 1)
    def _():
        h1pad_ref[TH + 1, :, :] = jnp.zeros((W + 2, planes), jnp.bfloat16)

    # ---- conv2 (3x3, BN2 folded) as 9 accumulate matmuls + ReLU ----
    # Static unrolled (dh, dw) offsets keep the window reads as cheap address
    # arithmetic (no dynamic lane/sublane shifts).
    acc = jnp.zeros((HW, planes), jnp.float32)
    for k in range(9):
        dh, dw = divmod(k, 3)
        win = h1pad_ref[dh:dh + TH, dw:dw + W, :].reshape(HW, planes)  # bf16
        acc = acc + jnp.dot(win, w2_ref[k],
                            preferred_element_type=jnp.float32)
    h2 = jnp.maximum(acc + b2_ref[...], 0.0)                  # (HW, planes) f32

    # ---- conv3 (1x1, BN3 folded) + residual + ReLU ----
    h3 = jnp.dot(h2.astype(jnp.bfloat16), w3_ref[...],
                 preferred_element_type=jnp.float32) + b3_ref[...]
    res = xm.reshape(HW, Cin).astype(jnp.float32)   # bf16-rounded skip (documented)
    out = jnp.maximum(h3 + res, 0.0)
    o_ref[0] = out.reshape(TH, W, Cout).astype(o_ref.dtype)


def _vmem_capacity_bytes():
    try:
        return int(pltpu.get_tpu_info().vmem_capacity_bytes)
    except Exception:
        return 64 * 1024 * 1024          # conservative (v7x-sized) fallback


def _pick_tile_rows(H, W, Cin, planes, budget_bytes):
    """Largest divisor of H whose per-step VMEM footprint fits budget_bytes."""
    # TODO(synk): for H with no good divisor use pl.cdiv + masking of the last
    # tile (pl.BoundedSlice) instead of degrading towards TH == 1.
    Cout = 4 * planes

    def footprint(th):
        hw = th * W
        x_blk = th * W * Cin * 2                       # bf16 input block
        o_blk = hw * Cout * 2                          # bf16 output block
        halo = 2 * W * Cin * 2
        h1pad = (th + 2) * (W + 2) * planes * 2        # bf16 scratch
        live = hw * (4 * planes + 3 * Cout) * 4        # rough f32 intermediates
        return 2 * (x_blk + o_blk) + halo + h1pad + live   # double-buffered I/O

    for th in sorted((d for d in range(1, H + 1) if H % d == 0), reverse=True):
        if footprint(th) <= budget_bytes:
            return th
    return 1


def bottleneck_pallas_nhwc(x_nhwc, params, *, tile_rows=None):
    """NHWC in / NHWC bf16 out. Eval-mode BN folded into the conv weights."""
    N, H, W, Cin = x_nhwc.shape
    planes = params["conv1_w"].shape[0]
    Cout = 4 * planes
    assert Cin == Cout, "downsample=None requires inplanes == planes * 4"

    vmem_cap = _vmem_capacity_bytes()
    if tile_rows is None:
        tile_rows = _pick_tile_rows(H, W, Cin, planes,
                                    budget_bytes=vmem_cap // 2)
    assert H % tile_rows == 0, "tile_rows must divide H"
    TH = tile_rows
    T = H // TH

    # ---- fold eval-mode BatchNorm: scale into weights, bias kept separate ----
    # TODO(synk): training-mode batch statistics are not implemented.
    def fold(prefix):
        g, b, m, v = (params[prefix + k] for k in ("_g", "_b", "_m", "_v"))
        s = g / jnp.sqrt(v + BN_EPS)
        return s, (b - m * s)

    s1, b1 = fold("bn1")
    s2, b2 = fold("bn2")
    s3, b3 = fold("bn3")

    w1 = (params["conv1_w"][:, :, 0, 0] * s1[:, None]).T.astype(jnp.bfloat16)
    w2 = jnp.stack(
        [(params["conv2_w"][:, :, kh, kw] * s2[:, None]).T
         for kh in range(3) for kw in range(3)], axis=0).astype(jnp.bfloat16)
    w3 = (params["conv3_w"][:, :, 0, 0] * s3[:, None]).T.astype(jnp.bfloat16)

    b1 = b1.reshape(1, -1).astype(jnp.float32)
    b2 = b2.reshape(1, -1).astype(jnp.float32)
    b3 = b3.reshape(1, -1).astype(jnp.float32)

    x_bf16 = x_nhwc.astype(jnp.bfloat16)
    # Row-flattened view (leading-dim merge -> no HBM copy) for the halo DMAs.
    x_rows = x_bf16.reshape(N * H, W, Cin)

    kernel = functools.partial(bottleneck_kernel,
                               TH=TH, H=H, W=W, planes=planes)

    def full_spec(a):
        return pl.BlockSpec(a.shape, lambda n, t, _nd=a.ndim: (0,) * _nd)

    return pl.pallas_call(
        kernel,
        out_shape=jax.ShapeDtypeStruct((N, H, W, Cout), jnp.bfloat16),
        grid=(N, T),
        in_specs=[
            pl.BlockSpec((1, TH, W, Cin), lambda n, t: (n, t, 0, 0)),
            pl.BlockSpec(memory_space=pl.ANY),       # whole input, halo DMAs
            full_spec(w1), full_spec(b1),
            full_spec(w2), full_spec(b2),
            full_spec(w3), full_spec(b3),
        ],
        out_specs=pl.BlockSpec((1, TH, W, Cout), lambda n, t: (n, t, 0, 0)),
        scratch_shapes=[
            pltpu.VMEM((2, W, Cin), jnp.bfloat16),
            pltpu.VMEM((TH + 2, W + 2, planes), jnp.bfloat16),
            pltpu.SemaphoreType.DMA((2,)),
        ],
        compiler_params=pltpu.CompilerParams(
            # batch axis "parallel" so v7x's two TensorCores both get work;
            # row-tile axis "arbitrary" so the once-per-core scratch zeroing
            # under pl.when(t == 0) stays valid on a sharded grid.
            dimension_semantics=("parallel", "arbitrary"),
            vmem_limit_bytes=int(0.75 * vmem_cap)),
    )(x_bf16, x_rows, w1, b1, w2, b2, w3, b3)


def bottleneck_pallas(x_nchw, params, *, tile_rows=None):
    """NCHW wrapper matching the PyTorch module layout.

    TODO(synk): in a real network keep activations NHWC end-to-end; these
    transposes cost an extra HBM round trip of the activation tensor.
    """
    x_nhwc = jnp.transpose(x_nchw, (0, 2, 3, 1))
    out = bottleneck_pallas_nhwc(x_nhwc, params, tile_rows=tile_rows)
    return jnp.transpose(out, (0, 3, 1, 2))


def bottleneck_ref(x, params):
    """Pure-JAX f32 NCHW reference mirroring the PyTorch forward (eval BN)."""
    dn = ("NCHW", "OIHW", "NCHW")

    def bn(y, prefix):
        g, b, m, v = (params[prefix + k] for k in ("_g", "_b", "_m", "_v"))
        g, b, m, v = (t[None, :, None, None] for t in (g, b, m, v))
        return (y - m) / jnp.sqrt(v + BN_EPS) * g + b

    out = lax.conv_general_dilated(x, params["conv1_w"], (1, 1), "VALID",
                                   dimension_numbers=dn,
                                   precision=lax.Precision.HIGHEST)
    out = jax.nn.relu(bn(out, "bn1"))
    out = lax.conv_general_dilated(out, params["conv2_w"], (1, 1),
                                   ((1, 1), (1, 1)), dimension_numbers=dn,
                                   precision=lax.Precision.HIGHEST)
    out = jax.nn.relu(bn(out, "bn2"))
    out = lax.conv_general_dilated(out, params["conv3_w"], (1, 1), "VALID",
                                   dimension_numbers=dn,
                                   precision=lax.Precision.HIGHEST)
    out = bn(out, "bn3")
    return jax.nn.relu(out + x)


if __name__ == "__main__":
    N, planes, H, W = 2, 4, 16, 16
    inplanes = planes * 4            # downsample=None => residual requires this
    Cout = planes * 4

    key = jax.random.PRNGKey(0)
    ks = jax.random.split(key, 16)
    params = {
        "conv1_w": 0.1 * jax.random.normal(ks[0], (planes, inplanes, 1, 1), jnp.float32),
        "conv2_w": 0.1 * jax.random.normal(ks[1], (planes, planes, 3, 3), jnp.float32),
        "conv3_w": 0.1 * jax.random.normal(ks[2], (Cout, planes, 1, 1), jnp.float32),
        "bn1_g": jax.random.uniform(ks[3], (planes,), jnp.float32, 0.5, 1.5),
        "bn1_b": 0.1 * jax.random.normal(ks[4], (planes,), jnp.float32),
        "bn1_m": 0.1 * jax.random.normal(ks[5], (planes,), jnp.float32),
        "bn1_v": jax.random.uniform(ks[6], (planes,), jnp.float32, 0.5, 1.5),
        "bn2_g": jax.random.uniform(ks[7], (planes,), jnp.float32, 0.5, 1.5),
        "bn2_b": 0.1 * jax.random.normal(ks[8], (planes,), jnp.float32),
        "bn2_m": 0.1 * jax.random.normal(ks[9], (planes,), jnp.float32),
        "bn2_v": jax.random.uniform(ks[10], (planes,), jnp.float32, 0.5, 1.5),
        "bn3_g": jax.random.uniform(ks[11], (Cout,), jnp.float32, 0.5, 1.5),
        "bn3_b": 0.1 * jax.random.normal(ks[12], (Cout,), jnp.float32),
        "bn3_m": 0.1 * jax.random.normal(ks[13], (Cout,), jnp.float32),
        "bn3_v": jax.random.uniform(ks[14], (Cout,), jnp.float32, 0.5, 1.5),
    }
    x = jax.random.normal(ks[15], (N, inplanes, H, W), jnp.float32)

    # tile_rows=4 -> grid (2, 4): exercises the halo-DMA / spatial-tiling path.
    out = jax.block_until_ready(bottleneck_pallas(x, params, tile_rows=4))
    ref = jax.block_until_ready(bottleneck_ref(x, params))

    assert out.shape == ref.shape == (N, Cout, H, W)
    out_f32 = np.asarray(jnp.asarray(out, jnp.float32))
    ref_f32 = np.asarray(ref)
    err = float(np.max(np.abs(out_f32 - ref_f32)))
    # Kernel runs bf16 activations/weights/output with f32 MXU accumulation;
    # the reference is f32 HIGHEST, so tolerance covers bf16 rounding of the
    # inputs, residual and final output.
    if not np.allclose(out_f32, ref_f32, rtol=5e-2, atol=5e-2):
        raise AssertionError(f"Pallas output mismatch vs reference, max abs err {err}")
    print("KERNEL_OK")
</pallas_src>

<mosaic_0001>
module attributes {stable_mosaic.version = 11 : i64} {
  func.func @bottleneck_kernel(%arg0: i32, %arg1: i32, %arg2: memref<1x4x16x16xbf16, #tpu.memory_space<vmem>>, %arg3: memref<32x16x16xbf16, #tpu.memory_space<any>>, %arg4: memref<16x4xbf16, #tpu.memory_space<vmem>>, %arg5: memref<1x4xf32, #tpu.memory_space<vmem>>, %arg6: memref<9x4x4xbf16, #tpu.memory_space<vmem>>, %arg7: memref<1x4xf32, #tpu.memory_space<vmem>>, %arg8: memref<4x16xbf16, #tpu.memory_space<vmem>>, %arg9: memref<1x16xf32, #tpu.memory_space<vmem>>, %arg10: memref<1x4x16x16xbf16, #tpu.memory_space<vmem>>, %arg11: memref<2x16x16xbf16, #tpu.memory_space<vmem>>, %arg12: memref<6x18x4xbf16, #tpu.memory_space<vmem>>, %arg13: memref<2x!tpu.dma_semaphore, #tpu.memory_space<semaphore_mem>>) attributes {dimension_semantics = [#tpu.dimension_semantics<parallel>, #tpu.dimension_semantics<arbitrary>], iteration_bounds = array<i64: 2, 4>, scalar_prefetch = 0 : i64, scratch_operands = 3 : i64, tpu.core_type = #tpu.core_type<tc>, window_params = [{transform_indices = @transform_0, window_bounds = array<i64: 1, 4, 16, 16>}, {}, {pipeline_mode = #tpu.pipeline_mode<synchronous>, transform_indices = @transform_2, window_bounds = array<i64: 16, 4>}, {pipeline_mode = #tpu.pipeline_mode<synchronous>, transform_indices = @transform_3, window_bounds = array<i64: 1, 4>}, {pipeline_mode = #tpu.pipeline_mode<synchronous>, transform_indices = @transform_4, window_bounds = array<i64: 9, 4, 4>}, {pipeline_mode = #tpu.pipeline_mode<synchronous>, transform_indices = @transform_5, window_bounds = array<i64: 1, 4>}, {pipeline_mode = #tpu.pipeline_mode<synchronous>, transform_indices = @transform_6, window_bounds = array<i64: 4, 16>}, {pipeline_mode = #tpu.pipeline_mode<synchronous>, transform_indices = @transform_7, window_bounds = array<i64: 1, 16>}, {transform_indices = @transform_8, window_bounds = array<i64: 1, 4, 16, 16>}]} {
    %c16_i32 = arith.constant 16 : i32
    %0 = arith.muli %arg0, %c16_i32 : i32
    %c4_i32 = arith.constant 4 : i32
    %1 = arith.muli %arg1, %c4_i32 : i32
    %c1_i32 = arith.constant 1 : i32
    %2 = arith.subi %1, %c1_i32 : i32
    %c0_i32 = arith.constant 0 : i32
    %3 = arith.maxsi %2, %c0_i32 : i32
    %4 = arith.addi %0, %3 : i32
    %c16_i32_0 = arith.constant 16 : i32
    %5 = arith.muli %arg0, %c16_i32_0 : i32
    %c1_i32_1 = arith.constant 1 : i32
    %6 = arith.addi %arg1, %c1_i32_1 : i32
    %c4_i32_2 = arith.constant 4 : i32
    %7 = arith.muli %6, %c4_i32_2 : i32
    %c15_i32 = arith.constant 15 : i32
    %8 = arith.minsi %7, %c15_i32 : i32
    %9 = arith.addi %5, %8 : i32
    %c0_i32_3 = arith.constant 0 : i32
    %c0_i32_4 = arith.constant 0 : i32
    %c0_i32_5 = arith.constant 0 : i32
    %10 = tpu.memref_slice %arg3[%4, %c0_i32_4, %c0_i32_5] : memref<32x16x16xbf16, #tpu.memory_space<any>> -> memref<1x16x16xbf16, #tpu.memory_space<any>>
    %c0_i32_6 = arith.constant 0 : i32
    %c0_i32_7 = arith.constant 0 : i32
    %c0_i32_8 = arith.constant 0 : i32
    %11 = tpu.memref_slice %arg11[%c0_i32_6, %c0_i32_7, %c0_i32_8] : memref<2x16x16xbf16, #tpu.memory_space<vmem>> -> memref<1x16x16xbf16, #tpu.memory_space<vmem>>
    %12 = tpu.memref_slice %arg13[%c0_i32_3] : memref<2x!tpu.dma_semaphore, #tpu.memory_space<semaphore_mem>> -> memref<1x!tpu.dma_semaphore, #tpu.memory_space<semaphore_mem>>
    %13 = tpu.memref_squeeze %12 : memref<1x!tpu.dma_semaphore, #tpu.memory_space<semaphore_mem>> -> memref<!tpu.dma_semaphore, #tpu.memory_space<semaphore_mem>>
    tpu.enqueue_dma source(%10 : memref<1x16x16xbf16, #tpu.memory_space<any>>) target(%11 : memref<1x16x16xbf16, #tpu.memory_space<vmem>>) target_semaphore(%13 : memref<!tpu.dma_semaphore, #tpu.memory_space<semaphore_mem>>)
    %c1_i32_9 = arith.constant 1 : i32
    %c0_i32_10 = arith.constant 0 : i32
    %c0_i32_11 = arith.constant 0 : i32
    %14 = tpu.memref_slice %arg3[%9, %c0_i32_10, %c0_i32_11] : memref<32x16x16xbf16, #tpu.memory_space<any>> -> memref<1x16x16xbf16, #tpu.memory_space<any>>
    %c1_i32_12 = arith.constant 1 : i32
    %c0_i32_13 = arith.constant 0 : i32
    %c0_i32_14 = arith.constant 0 : i32
    %15 = tpu.memref_slice %arg11[%c1_i32_12, %c0_i32_13, %c0_i32_14] : memref<2x16x16xbf16, #tpu.memory_space<vmem>> -> memref<1x16x16xbf16, #tpu.memory_space<vmem>>
    %16 = tpu.memref_slice %arg13[%c1_i32_9] : memref<2x!tpu.dma_semaphore, #tpu.memory_space<semaphore_mem>> -> memref<1x!tpu.dma_semaphore, #tpu.memory_space<semaphore_mem>>
    %17 = tpu.memref_squeeze %16 : memref<1x!tpu.dma_semaphore, #tpu.memory_space<semaphore_mem>> -> memref<!tpu.dma_semaphore, #tpu.memory_space<semaphore_mem>>
    tpu.enqueue_dma source(%14 : memref<1x16x16xbf16, #tpu.memory_space<any>>) target(%15 : memref<1x16x16xbf16, #tpu.memory_space<vmem>>) target_semaphore(%17 : memref<!tpu.dma_semaphore, #tpu.memory_space<semaphore_mem>>)
    %c0 = arith.constant 0 : index
    %c0_15 = arith.constant 0 : index
    %c0_16 = arith.constant 0 : index
    %c0_17 = arith.constant 0 : index
    %18 = vector.load %arg2[%c0, %c0_15, %c0_16, %c0_17] : memref<1x4x16x16xbf16, #tpu.memory_space<vmem>>, vector<1x4x16x16xbf16>
    %19 = vector.shape_cast %18 : vector<1x4x16x16xbf16> to vector<4x16x16xbf16>
    %20 = vector.shape_cast %19 : vector<4x16x16xbf16> to vector<64x16xbf16>
    %c0_18 = arith.constant 0 : index
    %c0_19 = arith.constant 0 : index
    %21 = vector.load %arg4[%c0_18, %c0_19] : memref<16x4xbf16, #tpu.memory_space<vmem>>, vector<16x4xbf16>
    %cst = arith.constant dense<0.000000e+00> : vector<64x4xf32>
    %22 = tpu.matmul %20, %21, %cst {dimension_numbers = #tpu.dot_dimension_numbers<[1], [0], [0], [1], [0, 0, 1, 1], [], []>} : vector<64x16xbf16>, vector<16x4xbf16>, vector<64x4xf32> -> vector<64x4xf32>
    %c0_20 = arith.constant 0 : index
    %c0_21 = arith.constant 0 : index
    %23 = vector.load %arg5[%c0_20, %c0_21] : memref<1x4xf32, #tpu.memory_space<vmem>>, vector<1x4xf32>
    %24 = vector.broadcast %23 : vector<1x4xf32> to vector<64x4xf32>
    %25 = arith.addf %22, %24 : vector<64x4xf32>
    %cst_22 = arith.constant 0.000000e+00 : f32
    %26 = vector.broadcast %cst_22 : f32 to vector<64x4xf32>
    %27 = arith.maximumf %25, %26 : vector<64x4xf32>
    %28 = vector.shape_cast %27 : vector<64x4xf32> to vector<4x16x4xf32>
    %29 = arith.truncf %28 : vector<4x16x4xf32> to vector<4x16x4xbf16>
    %c1 = arith.constant 1 : index
    %c1_23 = arith.constant 1 : index
    %c0_24 = arith.constant 0 : index
    %30 = vector.load %arg12[%c1, %c1_23, %c0_24] : memref<6x18x4xbf16, #tpu.memory_space<vmem>>, vector<4x16x4xbf16>
    tpu.vector_store %arg12[%c1, %c1_23, %c0_24], %29 {strides = array<i32>} : memref<6x18x4xbf16, #tpu.memory_space<vmem>>, vector<4x16x4xbf16>,
    %c0_i32_25 = arith.constant 0 : i32
    %31 = arith.cmpi eq, %arg1, %c0_i32_25 : i32
    %32 = arith.extui %31 : i1 to i32
    %c0_i32_26 = arith.constant 0 : i32
    %33 = arith.cmpi ne, %32, %c0_i32_26 : i32
    scf.if %33 {
      %cst_127 = arith.constant 0.000000e+00 : bf16
      %145 = vector.broadcast %cst_127 : bf16 to vector<6x4xbf16>
      %c0_128 = arith.constant 0 : index
      %c0_129 = arith.constant 0 : index
      %c0_130 = arith.constant 0 : index
      %146 = vector.load %arg12[%c0_128, %c0_129, %c0_130] : memref<6x18x4xbf16, #tpu.memory_space<vmem>>, vector<6x1x4xbf16>
      %147 = vector.shape_cast %146 : vector<6x1x4xbf16> to vector<6x4xbf16>
      %148 = vector.shape_cast %145 : vector<6x4xbf16> to vector<6x1x4xbf16>
      tpu.vector_store %arg12[%c0_128, %c0_129, %c0_130], %148 {strides = array<i32>} : memref<6x18x4xbf16, #tpu.memory_space<vmem>>, vector<6x1x4xbf16>,
      %cst_131 = arith.constant 0.000000e+00 : bf16
      %149 = vector.broadcast %cst_131 : bf16 to vector<6x4xbf16>
      %c0_132 = arith.constant 0 : index
      %c17 = arith.constant 17 : index
      %c0_133 = arith.constant 0 : index
      %150 = vector.load %arg12[%c0_132, %c17, %c0_133] : memref<6x18x4xbf16, #tpu.memory_space<vmem>>, vector<6x1x4xbf16>
      %151 = vector.shape_cast %150 : vector<6x1x4xbf16> to vector<6x4xbf16>
      %152 = vector.shape_cast %149 : vector<6x4xbf16> to vector<6x1x4xbf16>
      tpu.vector_store %arg12[%c0_132, %c17, %c0_133], %152 {strides = array<i32>} : memref<6x18x4xbf16, #tpu.memory_space<vmem>>, vector<6x1x4xbf16>,
    } else {
    }
    %c0_i32_27 = arith.constant 0 : i32
    %c0_i32_28 = arith.constant 0 : i32
    %c0_i32_29 = arith.constant 0 : i32
    %34 = tpu.memref_slice %arg3[%4, %c0_i32_28, %c0_i32_29] : memref<32x16x16xbf16, #tpu.memory_space<any>> -> memref<1x16x16xbf16, #tpu.memory_space<any>>
    %c0_i32_30 = arith.constant 0 : i32
    %c0_i32_31 = arith.constant 0 : i32
    %c0_i32_32 = arith.constant 0 : i32
    %35 = tpu.memref_slice %arg11[%c0_i32_30, %c0_i32_31, %c0_i32_32] : memref<2x16x16xbf16, #tpu.memory_space<vmem>> -> memref<1x16x16xbf16, #tpu.memory_space<vmem>>
    %36 = tpu.memref_slice %arg13[%c0_i32_27] : memref<2x!tpu.dma_semaphore, #tpu.memory_space<semaphore_mem>> -> memref<1x!tpu.dma_semaphore, #tpu.memory_space<semaphore_mem>>
    %37 = tpu.memref_squeeze %36 : memref<1x!tpu.dma_semaphore, #tpu.memory_space<semaphore_mem>> -> memref<!tpu.dma_semaphore, #tpu.memory_space<semaphore_mem>>
    tpu.wait_dma2 semaphore(%37 : memref<!tpu.dma_semaphore, #tpu.memory_space<semaphore_mem>>) src(%34 : memref<1x16x16xbf16, #tpu.memory_space<any>>) dst(%35 : memref<1x16x16xbf16, #tpu.memory_space<vmem>>)
    %c1_i32_33 = arith.constant 1 : i32
    %c0_i32_34 = arith.constant 0 : i32
    %c0_i32_35 = arith.constant 0 : i32
    %38 = tpu.memref_slice %arg3[%9, %c0_i32_34, %c0_i32_35] : memref<32x16x16xbf16, #tpu.memory_space<any>> -> memref<1x16x16xbf16, #tpu.memory_space<any>>
    %c1_i32_36 = arith.constant 1 : i32
    %c0_i32_37 = arith.constant 0 : i32
    %c0_i32_38 = arith.constant 0 : i32
    %39 = tpu.memref_slice %arg11[%c1_i32_36, %c0_i32_37, %c0_i32_38] : memref<2x16x16xbf16, #tpu.memory_space<vmem>> -> memref<1x16x16xbf16, #tpu.memory_space<vmem>>
    %40 = tpu.memref_slice %arg13[%c1_i32_33] : memref<2x!tpu.dma_semaphore, #tpu.memory_space<semaphore_mem>> -> memref<1x!tpu.dma_semaphore, #tpu.memory_space<semaphore_mem>>
    %41 = tpu.memref_squeeze %40 : memref<1x!tpu.dma_semaphore, #tpu.memory_space<semaphore_mem>> -> memref<!tpu.dma_semaphore, #tpu.memory_space<semaphore_mem>>
    tpu.wait_dma2 semaphore(%41 : memref<!tpu.dma_semaphore, #tpu.memory_space<semaphore_mem>>) src(%38 : memref<1x16x16xbf16, #tpu.memory_space<any>>) dst(%39 : memref<1x16x16xbf16, #tpu.memory_space<vmem>>)
    %c0_39 = arith.constant 0 : index
    %c0_40 = arith.constant 0 : index
    %c0_41 = arith.constant 0 : index
    %42 = vector.load %arg11[%c0_39, %c0_40, %c0_41] : memref<2x16x16xbf16, #tpu.memory_space<vmem>>, vector<2x16x16xbf16>
    %43 = vector.shape_cast %42 : vector<2x16x16xbf16> to vector<32x16xbf16>
    %c0_42 = arith.constant 0 : index
    %c0_43 = arith.constant 0 : index
    %44 = vector.load %arg4[%c0_42, %c0_43] : memref<16x4xbf16, #tpu.memory_space<vmem>>, vector<16x4xbf16>
    %cst_44 = arith.constant dense<0.000000e+00> : vector<32x4xf32>
    %45 = tpu.matmul %43, %44, %cst_44 {dimension_numbers = #tpu.dot_dimension_numbers<[1], [0], [0], [1], [0, 0, 1, 1], [], []>} : vector<32x16xbf16>, vector<16x4xbf16>, vector<32x4xf32> -> vector<32x4xf32>
    %c0_45 = arith.constant 0 : index
    %c0_46 = arith.constant 0 : index
    %46 = vector.load %arg5[%c0_45, %c0_46] : memref<1x4xf32, #tpu.memory_space<vmem>>, vector<1x4xf32>
    %47 = vector.broadcast %46 : vector<1x4xf32> to vector<32x4xf32>
    %48 = arith.addf %45, %47 : vector<32x4xf32>
    %cst_47 = arith.constant 0.000000e+00 : f32
    %49 = vector.broadcast %cst_47 : f32 to vector<32x4xf32>
    %50 = arith.maximumf %48, %49 : vector<32x4xf32>
    %51 = vector.shape_cast %50 : vector<32x4xf32> to vector<2x16x4xf32>
    %52 = arith.truncf %51 : vector<2x16x4xf32> to vector<2x16x4xbf16>
    %53 = vector.extract_strided_slice %52 {offsets = [0, 0, 0], sizes = [1, 16, 4], strides = [1, 1, 1]} : vector<2x16x4xbf16> to vector<1x16x4xbf16>
    %54 = vector.shape_cast %53 : vector<1x16x4xbf16> to vector<16x4xbf16>
    %c0_48 = arith.constant 0 : index
    %c1_49 = arith.constant 1 : index
    %c0_50 = arith.constant 0 : index
    %55 = vector.load %arg12[%c0_48, %c1_49, %c0_50] : memref<6x18x4xbf16, #tpu.memory_space<vmem>>, vector<1x16x4xbf16>
    %56 = vector.shape_cast %55 : vector<1x16x4xbf16> to vector<16x4xbf16>
    %57 = vector.shape_cast %54 : vector<16x4xbf16> to vector<1x16x4xbf16>
    tpu.vector_store %arg12[%c0_48, %c1_49, %c0_50], %57 {strides = array<i32>} : memref<6x18x4xbf16, #tpu.memory_space<vmem>>, vector<1x16x4xbf16>,
    %58 = vector.extract_strided_slice %52 {offsets = [1, 0, 0], sizes = [1, 16, 4], strides = [1, 1, 1]} : vector<2x16x4xbf16> to vector<1x16x4xbf16>
    %59 = vector.shape_cast %58 : vector<1x16x4xbf16> to vector<16x4xbf16>
    %c5 = arith.constant 5 : index
    %c1_51 = arith.constant 1 : index
    %c0_52 = arith.constant 0 : index
    %60 = vector.load %arg12[%c5, %c1_51, %c0_52] : memref<6x18x4xbf16, #tpu.memory_space<vmem>>, vector<1x16x4xbf16>
    %61 = vector.shape_cast %60 : vector<1x16x4xbf16> to vector<16x4xbf16>
    %62 = vector.shape_cast %59 : vector<16x4xbf16> to vector<1x16x4xbf16>
    tpu.vector_store %arg12[%c5, %c1_51, %c0_52], %62 {strides = array<i32>} : memref<6x18x4xbf16, #tpu.memory_space<vmem>>, vector<1x16x4xbf16>,
    %c0_i32_53 = arith.constant 0 : i32
    %63 = arith.cmpi eq, %arg1, %c0_i32_53 : i32
    %64 = arith.extui %63 : i1 to i32
    %c0_i32_54 = arith.constant 0 : i32
    %65 = arith.cmpi ne, %64, %c0_i32_54 : i32
    scf.if %65 {
      %cst_127 = arith.constant 0.000000e+00 : bf16
      %145 = vector.broadcast %cst_127 : bf16 to vector<18x4xbf16>
      %c0_128 = arith.constant 0 : index
      %c0_129 = arith.constant 0 : index
      %c0_130 = arith.constant 0 : index
      %146 = vector.load %arg12[%c0_128, %c0_129, %c0_130] : memref<6x18x4xbf16, #tpu.memory_space<vmem>>, vector<1x18x4xbf16>
      %147 = vector.shape_cast %146 : vector<1x18x4xbf16> to vector<18x4xbf16>
      %148 = vector.shape_cast %145 : vector<18x4xbf16> to vector<1x18x4xbf16>
      tpu.vector_store %arg12[%c0_128, %c0_129, %c0_130], %148 {strides = array<i32>} : memref<6x18x4xbf16, #tpu.memory_space<vmem>>, vector<1x18x4xbf16>,
    } else {
    }
    %c3_i32 = arith.constant 3 : i32
    %66 = arith.cmpi eq, %arg1, %c3_i32 : i32
    %67 = arith.extui %66 : i1 to i32
    %c0_i32_55 = arith.constant 0 : i32
    %68 = arith.cmpi ne, %67, %c0_i32_55 : i32
    scf.if %68 {
      %cst_127 = arith.constant 0.000000e+00 : bf16
      %145 = vector.broadcast %cst_127 : bf16 to vector<18x4xbf16>
      %c5_128 = arith.constant 5 : index
      %c0_129 = arith.constant 0 : index
      %c0_130 = arith.constant 0 : index
      %146 = vector.load %arg12[%c5_128, %c0_129, %c0_130] : memref<6x18x4xbf16, #tpu.memory_space<vmem>>, vector<1x18x4xbf16>
      %147 = vector.shape_cast %146 : vector<1x18x4xbf16> to vector<18x4xbf16>
      %148 = vector.shape_cast %145 : vector<18x4xbf16> to vector<1x18x4xbf16>
      tpu.vector_store %arg12[%c5_128, %c0_129, %c0_130], %148 {strides = array<i32>} : memref<6x18x4xbf16, #tpu.memory_space<vmem>>, vector<1x18x4xbf16>,
    } else {
    }
    %cst_56 = arith.constant 0.000000e+00 : f32
    %69 = vector.broadcast %cst_56 : f32 to vector<64x4xf32>
    %c0_57 = arith.constant 0 : index
    %c0_58 = arith.constant 0 : index
    %c0_59 = arith.constant 0 : index
    %70 = vector.load %arg12[%c0_57, %c0_58, %c0_59] : memref<6x18x4xbf16, #tpu.memory_space<vmem>>, vector<4x16x4xbf16>
    %71 = vector.shape_cast %70 : vector<4x16x4xbf16> to vector<64x4xbf16>
    %c0_60 = arith.constant 0 : index
    %c0_61 = arith.constant 0 : index
    %c0_62 = arith.constant 0 : index
    %72 = vector.load %arg6[%c0_60, %c0_61, %c0_62] : memref<9x4x4xbf16, #tpu.memory_space<vmem>>, vector<1x4x4xbf16>
    %73 = vector.shape_cast %72 : vector<1x4x4xbf16> to vector<4x4xbf16>
    %cst_63 = arith.constant dense<0.000000e+00> : vector<64x4xf32>
    %74 = tpu.matmul %71, %73, %cst_63 {dimension_numbers = #tpu.dot_dimension_numbers<[1], [0], [0], [1], [0, 0, 1, 1], [], []>} : vector<64x4xbf16>, vector<4x4xbf16>, vector<64x4xf32> -> vector<64x4xf32>
    %75 = arith.addf %69, %74 : vector<64x4xf32>
    %c0_64 = arith.constant 0 : index
    %c1_65 = arith.constant 1 : index
    %c0_66 = arith.constant 0 : index
    %76 = vector.load %arg12[%c0_64, %c1_65, %c0_66] : memref<6x18x4xbf16, #tpu.memory_space<vmem>>, vector<4x16x4xbf16>
    %77 = vector.shape_cast %76 : vector<4x16x4xbf16> to vector<64x4xbf16>
    %c1_67 = arith.constant 1 : index
    %c0_68 = arith.constant 0 : index
    %c0_69 = arith.constant 0 : index
    %78 = vector.load %arg6[%c1_67, %c0_68, %c0_69] : memref<9x4x4xbf16, #tpu.memory_space<vmem>>, vector<1x4x4xbf16>
    %79 = vector.shape_cast %78 : vector<1x4x4xbf16> to vector<4x4xbf16>
    %cst_70 = arith.constant dense<0.000000e+00> : vector<64x4xf32>
    %80 = tpu.matmul %77, %79, %cst_70 {dimension_numbers = #tpu.dot_dimension_numbers<[1], [0], [0], [1], [0, 0, 1, 1], [], []>} : vector<64x4xbf16>, vector<4x4xbf16>, vector<64x4xf32> -> vector<64x4xf32>
    %81 = arith.addf %75, %80 : vector<64x4xf32>
    %c0_71 = arith.constant 0 : index
    %c2 = arith.constant 2 : index
    %c0_72 = arith.constant 0 : index
    %82 = vector.load %arg12[%c0_71, %c2, %c0_72] : memref<6x18x4xbf16, #tpu.memory_space<vmem>>, vector<4x16x4xbf16>
    %83 = vector.shape_cast %82 : vector<4x16x4xbf16> to vector<64x4xbf16>
    %c2_73 = arith.constant 2 : index
    %c0_74 = arith.constant 0 : index
    %c0_75 = arith.constant 0 : index
    %84 = vector.load %arg6[%c2_73, %c0_74, %c0_75] : memref<9x4x4xbf16, #tpu.memory_space<vmem>>, vector<1x4x4xbf16>
    %85 = vector.shape_cast %84 : vector<1x4x4xbf16> to vector<4x4xbf16>
    %cst_76 = arith.constant dense<0.000000e+00> : vector<64x4xf32>
    %86 = tpu.matmul %83, %85, %cst_76 {dimension_numbers = #tpu.dot_dimension_numbers<[1], [0], [0], [1], [0, 0, 1, 1], [], []>} : vector<64x4xbf16>, vector<4x4xbf16>, vector<64x4xf32> -> vector<64x4xf32>
    %87 = arith.addf %81, %86 : vector<64x4xf32>
    %c1_77 = arith.constant 1 : index
    %c0_78 = arith.constant 0 : index
    %c0_79 = arith.constant 0 : index
    %88 = vector.load %arg12[%c1_77, %c0_78, %c0_79] : memref<6x18x4xbf16, #tpu.memory_space<vmem>>, vector<4x16x4xbf16>
    %89 = vector.shape_cast %88 : vector<4x16x4xbf16> to vector<64x4xbf16>
    %c3 = arith.constant 3 : index
    %c0_80 = arith.constant 0 : index
    %c0_81 = arith.constant 0 : index
    %90 = vector.load %arg6[%c3, %c0_80, %c0_81] : memref<9x4x4xbf16, #tpu.memory_space<vmem>>, vector<1x4x4xbf16>
    %91 = vector.shape_cast %90 : vector<1x4x4xbf16> to vector<4x4xbf16>
    %cst_82 = arith.constant dense<0.000000e+00> : vector<64x4xf32>
    %92 = tpu.matmul %89, %91, %cst_82 {dimension_numbers = #tpu.dot_dimension_numbers<[1], [0], [0], [1], [0, 0, 1, 1], [], []>} : vector<64x4xbf16>, vector<4x4xbf16>, vector<64x4xf32> -> vector<64x4xf32>
    %93 = arith.addf %87, %92 : vector<64x4xf32>
    %c1_83 = arith.constant 1 : index
    %c1_84 = arith.constant 1 : index
    %c0_85 = arith.constant 0 : index
    %94 = vector.load %arg12[%c1_83, %c1_84, %c0_85] : memref<6x18x4xbf16, #tpu.memory_space<vmem>>, vector<4x16x4xbf16>
    %95 = vector.shape_cast %94 : vector<4x16x4xbf16> to vector<64x4xbf16>
    %c4 = arith.constant 4 : index
    %c0_86 = arith.constant 0 : index
    %c0_87 = arith.constant 0 : index
    %96 = vector.load %arg6[%c4, %c0_86, %c0_87] : memref<9x4x4xbf16, #tpu.memory_space<vmem>>, vector<1x4x4xbf16>
    %97 = vector.shape_cast %96 : vector<1x4x4xbf16> to vector<4x4xbf16>
    %cst_88 = arith.constant dense<0.000000e+00> : vector<64x4xf32>
    %98 = tpu.matmul %95, %97, %cst_88 {dimension_numbers = #tpu.dot_dimension_numbers<[1], [0], [0], [1], [0, 0, 1, 1], [], []>} : vector<64x4xbf16>, vector<4x4xbf16>, vector<64x4xf32> -> vector<64x4xf32>
    %99 = arith.addf %93, %98 : vector<64x4xf32>
    %c1_89 = arith.constant 1 : index
    %c2_90 = arith.constant 2 : index
    %c0_91 = arith.constant 0 : index
    %100 = vector.load %arg12[%c1_89, %c2_90, %c0_91] : memref<6x18x4xbf16, #tpu.memory_space<vmem>>, vector<4x16x4xbf16>
    %101 = vector.shape_cast %100 : vector<4x16x4xbf16> to vector<64x4xbf16>
    %c5_92 = arith.constant 5 : index
    %c0_93 = arith.constant 0 : index
    %c0_94 = arith.constant 0 : index
    %102 = vector.load %arg6[%c5_92, %c0_93, %c0_94] : memref<9x4x4xbf16, #tpu.memory_space<vmem>>, vector<1x4x4xbf16>
    %103 = vector.shape_cast %102 : vector<1x4x4xbf16> to vector<4x4xbf16>
    %cst_95 = arith.constant dense<0.000000e+00> : vector<64x4xf32>
    %104 = tpu.matmul %101, %103, %cst_95 {dimension_numbers = #tpu.dot_dimension_numbers<[1], [0], [0], [1], [0, 0, 1, 1], [], []>} : vector<64x4xbf16>, vector<4x4xbf16>, vector<64x4xf32> -> vector<64x4xf32>
    %105 = arith.addf %99, %104 : vector<64x4xf32>
    %c2_96 = arith.constant 2 : index
    %c0_97 = arith.constant 0 : index
    %c0_98 = arith.constant 0 : index
    %106 = vector.load %arg12[%c2_96, %c0_97, %c0_98] : memref<6x18x4xbf16, #tpu.memory_space<vmem>>, vector<4x16x4xbf16>
    %107 = vector.shape_cast %106 : vector<4x16x4xbf16> to vector<64x4xbf16>
    %c6 = arith.constant 6 : index
    %c0_99 = arith.constant 0 : index
    %c0_100 = arith.constant 0 : index
    %108 = vector.load %arg6[%c6, %c0_99, %c0_100] : memref<9x4x4xbf16, #tpu.memory_space<vmem>>, vector<1x4x4xbf16>
    %109 = vector.shape_cast %108 : vector<1x4x4xbf16> to vector<4x4xbf16>
    %cst_101 = arith.constant dense<0.000000e+00> : vector<64x4xf32>
    %110 = tpu.matmul %107, %109, %cst_101 {dimension_numbers = #tpu.dot_dimension_numbers<[1], [0], [0], [1], [0, 0, 1, 1], [], []>} : vector<64x4xbf16>, vector<4x4xbf16>, vector<64x4xf32> -> vector<64x4xf32>
    %111 = arith.addf %105, %110 : vector<64x4xf32>
    %c2_102 = arith.constant 2 : index
    %c1_103 = arith.constant 1 : index
    %c0_104 = arith.constant 0 : index
    %112 = vector.load %arg12[%c2_102, %c1_103, %c0_104] : memref<6x18x4xbf16, #tpu.memory_space<vmem>>, vector<4x16x4xbf16>
    %113 = vector.shape_cast %112 : vector<4x16x4xbf16> to vector<64x4xbf16>
    %c7 = arith.constant 7 : index
    %c0_105 = arith.constant 0 : index
    %c0_106 = arith.constant 0 : index
    %114 = vector.load %arg6[%c7, %c0_105, %c0_106] : memref<9x4x4xbf16, #tpu.memory_space<vmem>>, vector<1x4x4xbf16>
    %115 = vector.shape_cast %114 : vector<1x4x4xbf16> to vector<4x4xbf16>
    %cst_107 = arith.constant dense<0.000000e+00> : vector<64x4xf32>
    %116 = tpu.matmul %113, %115, %cst_107 {dimension_numbers = #tpu.dot_dimension_numbers<[1], [0], [0], [1], [0, 0, 1, 1], [], []>} : vector<64x4xbf16>, vector<4x4xbf16>, vector<64x4xf32> -> vector<64x4xf32>
    %117 = arith.addf %111, %116 : vector<64x4xf32>
    %c2_108 = arith.constant 2 : index
    %c2_109 = arith.constant 2 : index
    %c0_110 = arith.constant 0 : index
    %118 = vector.load %arg12[%c2_108, %c2_109, %c0_110] : memref<6x18x4xbf16, #tpu.memory_space<vmem>>, vector<4x16x4xbf16>
    %119 = vector.shape_cast %118 : vector<4x16x4xbf16> to vector<64x4xbf16>
    %c8 = arith.constant 8 : index
    %c0_111 = arith.constant 0 : index
    %c0_112 = arith.constant 0 : index
    %120 = vector.load %arg6[%c8, %c0_111, %c0_112] : memref<9x4x4xbf16, #tpu.memory_space<vmem>>, vector<1x4x4xbf16>
    %121 = vector.shape_cast %120 : vector<1x4x4xbf16> to vector<4x4xbf16>
    %cst_113 = arith.constant dense<0.000000e+00> : vector<64x4xf32>
    %122 = tpu.matmul %119, %121, %cst_113 {dimension_numbers = #tpu.dot_dimension_numbers<[1], [0], [0], [1], [0, 0, 1, 1], [], []>} : vector<64x4xbf16>, vector<4x4xbf16>, vector<64x4xf32> -> vector<64x4xf32>
    %123 = arith.addf %117, %122 : vector<64x4xf32>
    %c0_114 = arith.constant 0 : index
    %c0_115 = arith.constant 0 : index
    %124 = vector.load %arg7[%c0_114, %c0_115] : memref<1x4xf32, #tpu.memory_space<vmem>>, vector<1x4xf32>
    %125 = vector.broadcast %124 : vector<1x4xf32> to vector<64x4xf32>
    %126 = arith.addf %123, %125 : vector<64x4xf32>
    %cst_116 = arith.constant 0.000000e+00 : f32
    %127 = vector.broadcast %cst_116 : f32 to vector<64x4xf32>
    %128 = arith.maximumf %126, %127 : vector<64x4xf32>
    %129 = arith.truncf %128 : vector<64x4xf32> to vector<64x4xbf16>
    %c0_117 = arith.constant 0 : index
    %c0_118 = arith.constant 0 : index
    %130 = vector.load %arg8[%c0_117, %c0_118] : memref<4x16xbf16, #tpu.memory_space<vmem>>, vector<4x16xbf16>
    %cst_119 = arith.constant dense<0.000000e+00> : vector<64x16xf32>
    %131 = tpu.matmul %129, %130, %cst_119 {dimension_numbers = #tpu.dot_dimension_numbers<[1], [0], [0], [1], [0, 0, 1, 1], [], []>} : vector<64x4xbf16>, vector<4x16xbf16>, vector<64x16xf32> -> vector<64x16xf32>
    %c0_120 = arith.constant 0 : index
    %c0_121 = arith.constant 0 : index
    %132 = vector.load %arg9[%c0_120, %c0_121] : memref<1x16xf32, #tpu.memory_space<vmem>>, vector<1x16xf32>
    %133 = vector.broadcast %132 : vector<1x16xf32> to vector<64x16xf32>
    %134 = arith.addf %131, %133 : vector<64x16xf32>
    %135 = vector.shape_cast %19 : vector<4x16x16xbf16> to vector<64x16xbf16>
    %136 = arith.extf %135 : vector<64x16xbf16> to vector<64x16xf32>
    %137 = arith.addf %134, %136 : vector<64x16xf32>
    %cst_122 = arith.constant 0.000000e+00 : f32
    %138 = vector.broadcast %cst_122 : f32 to vector<64x16xf32>
    %139 = arith.maximumf %137, %138 : vector<64x16xf32>
    %140 = vector.shape_cast %139 : vector<64x16xf32> to vector<4x16x16xf32>
    %141 = arith.truncf %140 : vector<4x16x16xf32> to vector<4x16x16xbf16>
    %c0_123 = arith.constant 0 : index
    %c0_124 = arith.constant 0 : index
    %c0_125 = arith.constant 0 : index
    %c0_126 = arith.constant 0 : index
    %142 = vector.load %arg10[%c0_123, %c0_124, %c0_125, %c0_126] : memref<1x4x16x16xbf16, #tpu.memory_space<vmem>>, vector<1x4x16x16xbf16>
    %143 = vector.shape_cast %142 : vector<1x4x16x16xbf16> to vector<4x16x16xbf16>
    %144 = vector.shape_cast %141 : vector<4x16x16xbf16> to vector<1x4x16x16xbf16>
    tpu.vector_store %arg10[%c0_123, %c0_124, %c0_125, %c0_126], %144 {strides = array<i32>} : memref<1x4x16x16xbf16, #tpu.memory_space<vmem>>, vector<1x4x16x16xbf16>,
    return
  }
  func.func @transform_0(%arg0: i32, %arg1: i32) -> (i32, i32, i32, i32) {
    %c0_i32 = arith.constant 0 : i32
    %c0_i32_0 = arith.constant 0 : i32
    %c0_i32_1 = arith.constant 0 : i32
    return %arg0, %arg1, %c0_i32, %c0_i32_0 : i32, i32, i32, i32
  }
  func.func @transform_2(%arg0: i32, %arg1: i32) -> (i32, i32) {
    %c0_i32 = arith.constant 0 : i32
    %c0_i32_0 = arith.constant 0 : i32
    %c0_i32_1 = arith.constant 0 : i32
    return %c0_i32, %c0_i32_0 : i32, i32
  }
  func.func @transform_3(%arg0: i32, %arg1: i32) -> (i32, i32) {
    %c0_i32 = arith.constant 0 : i32
    %c0_i32_0 = arith.constant 0 : i32
    %c0_i32_1 = arith.constant 0 : i32
    return %c0_i32, %c0_i32_0 : i32, i32
  }
  func.func @transform_4(%arg0: i32, %arg1: i32) -> (i32, i32, i32) {
    %c0_i32 = arith.constant 0 : i32
    %c0_i32_0 = arith.constant 0 : i32
    %c0_i32_1 = arith.constant 0 : i32
    %c0_i32_2 = arith.constant 0 : i32
    return %c0_i32, %c0_i32_0, %c0_i32_1 : i32, i32, i32
  }
  func.func @transform_5(%arg0: i32, %arg1: i32) -> (i32, i32) {
    %c0_i32 = arith.constant 0 : i32
    %c0_i32_0 = arith.constant 0 : i32
    %c0_i32_1 = arith.constant 0 : i32
    return %c0_i32, %c0_i32_0 : i32, i32
  }
  func.func @transform_6(%arg0: i32, %arg1: i32) -> (i32, i32) {
    %c0_i32 = arith.constant 0 : i32
    %c0_i32_0 = arith.constant 0 : i32
    %c0_i32_1 = arith.constant 0 : i32
    return %c0_i32, %c0_i32_0 : i32, i32
  }
  func.func @transform_7(%arg0: i32, %arg1: i32) -> (i32, i32) {
    %c0_i32 = arith.constant 0 : i32
    %c0_i32_0 = arith.constant 0 : i32
    %c0_i32_1 = arith.constant 0 : i32
    return %c0_i32, %c0_i32_0 : i32, i32
  }
  func.func @transform_8(%arg0: i32, %arg1: i32) -> (i32, i32, i32, i32) {
    %c0_i32 = arith.constant 0 : i32
    %c0_i32_0 = arith.constant 0 : i32
    %c0_i32_1 = arith.constant 0 : i32
    return %arg0, %arg1, %c0_i32, %c0_i32_0 : i32, i32, i32, i32
  }
}

</mosaic_0001>

<llo_original>
// kernel: tpu_custom_call.1
$region0: #{tpu_custom_call.1}
  #allocation0 [shape = 'u32[]', space=smem, size = 0x4, offset = 0x4, fixed_abs, tag = 'smem constant byte address 0x4 - core index']
  #allocation1 [shape = 'u32[144,128]{1,0:T(1,128)}', space=vmem, size = 0x12000, scoped, tag = 'internal scratch']
  #allocation2 [shape = 'bf16[2,16,16]{2,1,0:T(16,128)(2,1)}', space=vmem, size = 0x2000, scoped, tag = 'scratch operand']
  #allocation3 [shape = 'bf16[6,18,4]{2,1,0:T(8,128)(2,1)}', space=vmem, size = 0x9000, scoped, tag = 'scratch operand']
  #allocation4 [shape = 's32[2]{0}', space=sflag, size = 0x8, scoped, tag = 'scratch operand']
  #allocation7 [shape = 's32[]', space=sflag, size = 0x4, offset = 0, fixed_abs, tag = 'sflag constant byte address 0x0 - dummy sync flag']
  #allocation8 [shape = 's32[]', space=sflag, size = 0x4, offset = 0, fixed_abs, tag = 'sflag constant byte address 0x0 - dummy sync flag']
  %s0 = inlined_call_operand.vmem [shape: bf16[2,16,16,16], index: 0, kind: input, shape index: {}]
  %s1 = inlined_call_operand.vmem [shape: bf16[32,16,16], index: 1, kind: input, shape index: {}]
  %s2 = inlined_call_operand.vmem [shape: bf16[16,4], index: 2, kind: input, shape index: {}]
  %s3 = inlined_call_operand.vmem [shape: f32[1,4], index: 3, kind: input, shape index: {}]
  %s4 = inlined_call_operand.vmem [shape: bf16[9,4,4], index: 4, kind: input, shape index: {}]
  %s5 = inlined_call_operand.vmem [shape: f32[1,4], index: 5, kind: input, shape index: {}]
  %s6 = inlined_call_operand.vmem [shape: bf16[4,16], index: 6, kind: input, shape index: {}]
  %s7 = inlined_call_operand.vmem [shape: f32[1,16], index: 7, kind: input, shape index: {}]
  %s8 = inlined_call_operand.hbm [shape: bf16[2,16,16,16], index: 8, kind: output, shape index: {}]
  %s9 = sld [smem:[#allocation0]]
  $region141: #{tpu_custom_call.1} parent=0
    _
  %s11 = ssub.s32 1, %s9
  %s12 = scalar_select 0, %s11, %s9
  $region1: #{tpu_custom_call.1} parent=0
    #allocation5 [shape = 'u8[32768]{0}', space=vmem, size = 0x8000, scoped, tag = 'output window, operand 0']
    #allocation6 [shape = 's32[2]{0}', space=sflag, size = 0x8, scoped, tag = 'scoped memory for tpu_custom_call.1']
    %13 = vsyncpa [#allocation6], 0
    %s14 = scalar_lea.sflag [#allocation6], 1
    %15 = vsyncpa %s14, 0
    loop: start=0, step=1, limit=10
    $region2: #{tpu_custom_call.1} parent=1 // loop_pre_header
      _
    $region3: #{tpu_custom_call.1} parent=1 // loop_header
      %s17 = sphi 0, %s21
      %p18 = scmp.ge.s32.totalorder %s17, 10
      %s24 = sphi 0, %s36
      %s25 = sphi 0, %s32
      %s26 = sphi 0, %s24
      %s27 = sphi 0, %s25
      %s28 = sphi 0, %s26
      %s29 = sphi 0, %s27
      %s41 = sphi 0, %s43
      %s44 = sphi 0, %s41
      %s45 = sphi 0, %s44
      %s61 = sphi 0, %s45
      %s65 = sphi 0, %s65
      %s67 = sphi 0, %s65
      %s68 = sphi 0, %s67
      %s82 = sphi 0, %s68
      %s86 = sphi 0, %s86
      %s88 = sphi 0, %s86
      %s89 = sphi 0, %s88
      %s103 = sphi 0, %s89
      %s107 = sphi 0, %s107
      %s109 = sphi 0, %s107
      %s110 = sphi 0, %s109
      %s124 = sphi 0, %s110
      %s128 = sphi 0, %s128
      %s130 = sphi 0, %s128
      %s131 = sphi 0, %s130
      %s145 = sphi 0, %s131
      %s149 = sphi 0, %s149
      %s151 = sphi 0, %s149
      %s152 = sphi 0, %s151
      %s166 = sphi 0, %s152
      %s170 = sphi 0, %s170
      %s172 = sphi 0, %s170
      %s173 = sphi 0, %s172
      %s187 = sphi 0, %s173
      %s195 = sphi 0, %s197
      %s198 = sphi 0, %s195
      %s199 = sphi 0, %s198
      %s215 = sphi 0, %s199
    $region4: #{tpu_custom_call.1} parent=1 // loop_header_branch
      %20 = sbr.rel (%p18) target = $region8
    $region5: #{tpu_custom_call.1} parent=1 // loop_body
      %s22 = ssub.s32 %s17, 1
      %s23 = ssub.s32 %s17, 2
      %s30 = sadd.s32 1, %s25
      %p31 = scmp.ge.s32.totalorder %s30, 4
      %s32 = scalar_select %p31, 0, %s30
      %s33 = sadd.s32 1, %s24
      %s34 = scalar_select %p31, %s33, %s24
      %p35 = scmp.ge.s32.totalorder %s34, 2
      %s36 = scalar_select %p35, 0, %s34
      %s37 = ssub.s32 %s24, %s36
      %s38 = ssub.s32 %s25, %s32
      %s39 = sor.u32 %s37, %s38
      %p40 = scmp.eq.s32.totalorder %s39, 0
      %s42 = sadd.s32 %s41, 1
      %s43 = scalar_select %p40, %s41, %s42
      %p46 = pneg %p40
      %p47 = scmp.eq.s32.totalorder %s17, 7
      %p48 = por %p46, %p47
      %p49 = scmp.ne.s32.totalorder %s41, %s44
      %p50 = scmp.eq.s32.totalorder %s17, 0
      %p51 = por %p49, %p50
      %p52 = scmp.ne.s32.totalorder %s41, %s44
      %p53 = scmp.eq.s32.totalorder %s22, 7
      %p54 = por %p52, %p53
      %p55 = scmp.ne.s32.totalorder %s44, %s45
      %p56 = scmp.eq.s32.totalorder %s22, 0
      %p57 = por %p55, %p56
      %p58 = scmp.ne.s32.totalorder %s44, %s45
      %p59 = scmp.eq.s32.totalorder %s23, 7
      %p60 = por %p58, %p59
      %p62 = scmp.ne.s32.totalorder %s45, %s61
      %p63 = scmp.eq.s32.totalorder %s23, 0
      %p64 = por %p62, %p63
      %s66 = sadd.s32 %s65, 1
      %p69 = scmp.eq.s32.totalorder %s17, 7
      %p70 = scmp.ne.s32.totalorder %s65, %s67
      %p71 = scmp.eq.s32.totalorder %s17, 0
      %p72 = por %p70, %p71
      %p73 = scmp.ne.s32.totalorder %s65, %s67
      %p74 = scmp.eq.s32.totalorder %s22, 7
      %p75 = por %p73, %p74
      %p76 = scmp.ne.s32.totalorder %s67, %s68
      %p77 = scmp.eq.s32.totalorder %s22, 0
      %p78 = por %p76, %p77
      %p79 = scmp.ne.s32.totalorder %s67, %s68
      %p80 = scmp.eq.s32.totalorder %s23, 7
      %p81 = por %p79, %p80
      %p83 = scmp.ne.s32.totalorder %s68, %s82
      %p84 = scmp.eq.s32.totalorder %s23, 0
      %p85 = por %p83, %p84
      %s87 = sadd.s32 %s86, 1
      %p90 = scmp.eq.s32.totalorder %s17, 7
      %p91 = scmp.ne.s32.totalorder %s86, %s88
      %p92 = scmp.eq.s32.totalorder %s17, 0
      %p93 = por %p91, %p92
      %p94 = scmp.ne.s32.totalorder %s86, %s88
      %p95 = scmp.eq.s32.totalorder %s22, 7
      %p96 = por %p94, %p95
      %p97 = scmp.ne.s32.totalorder %s88, %s89
      %p98 = scmp.eq.s32.totalorder %s22, 0
      %p99 = por %p97, %p98
      %p100 = scmp.ne.s32.totalorder %s88, %s89
      %p101 = scmp.eq.s32.totalorder %s23, 7
      %p102 = por %p100, %p101
      %p104 = scmp.ne.s32.totalorder %s89, %s103
      %p105 = scmp.eq.s32.totalorder %s23, 0
      %p106 = por %p104, %p105
      %s108 = sadd.s32 %s107, 1
      %p111 = scmp.eq.s32.totalorder %s17, 7
      %p112 = scmp.ne.s32.totalorder %s107, %s109
      %p113 = scmp.eq.s32.totalorder %s17, 0
      %p114 = por %p112, %p113
      %p115 = scmp.ne.s32.totalorder %s107, %s109
      %p116 = scmp.eq.s32.totalorder %s22, 7
      %p117 = por %p115, %p116
      %p118 = scmp.ne.s32.totalorder %s109, %s110
      %p119 = scmp.eq.s32.totalorder %s22, 0
      %p120 = por %p118, %p119
      %p121 = scmp.ne.s32.totalorder %s109, %s110
      %p122 = scmp.eq.s32.totalorder %s23, 7
      %p123 = por %p121, %p122
      %p125 = scmp.ne.s32.totalorder %s110, %s124
      %p126 = scmp.eq.s32.totalorder %s23, 0
      %p127 = por %p125, %p126
      %s129 = sadd.s32 %s128, 1
      %p132 = scmp.eq.s32.totalorder %s17, 7
      %p133 = scmp.ne.s32.totalorder %s128, %s130
      %p134 = scmp.eq.s32.totalorder %s17, 0
      %p135 = por %p133, %p134
      %p136 = scmp.ne.s32.totalorder %s128, %s130
      %p137 = scmp.eq.s32.totalorder %s22, 7
      %p138 = por %p136, %p137
      %p139 = scmp.ne.s32.totalorder %s130, %s131
      %p140 = scmp.eq.s32.totalorder %s22, 0
      %p141 = por %p139, %p140
      %p142 = scmp.ne.s32.totalorder %s130, %s131
      %p143 = scmp.eq.s32.totalorder %s23, 7
      %p144 = por %p142, %p143
      %p146 = scmp.ne.s32.totalorder %s131, %s145
      %p147 = scmp.eq.s32.totalorder %s23, 0
      %p148 = por %p146, %p147
      %s150 = sadd.s32 %s149, 1
      %p153 = scmp.eq.s32.totalorder %s17, 7
      %p154 = scmp.ne.s32.totalorder %s149, %s151
      %p155 = scmp.eq.s32.totalorder %s17, 0
      %p156 = por %p154, %p155
      %p157 = scmp.ne.s32.totalorder %s149, %s151
      %p158 = scmp.eq.s32.totalorder %s22, 7
      %p159 = por %p157, %p158
      %p160 = scmp.ne.s32.totalorder %s151, %s152
      %p161 = scmp.eq.s32.totalorder %s22, 0
      %p162 = por %p160, %p161
      %p163 = scmp.ne.s32.totalorder %s151, %s152
      %p164 = scmp.eq.s32.totalorder %s23, 7
      %p165 = por %p163, %p164
      %p167 = scmp.ne.s32.totalorder %s152, %s166
      %p168 = scmp.eq.s32.totalorder %s23, 0
      %p169 = por %p167, %p168
      %s171 = sadd.s32 %s170, 1
      %p174 = scmp.eq.s32.totalorder %s17, 7
      %p175 = scmp.ne.s32.totalorder %s170, %s172
      %p176 = scmp.eq.s32.totalorder %s17, 0
      %p177 = por %p175, %p176
      %p178 = scmp.ne.s32.totalorder %s170, %s172
      %p179 = scmp.eq.s32.totalorder %s22, 7
      %p180 = por %p178, %p179
      %p181 = scmp.ne.s32.totalorder %s172, %s173
      %p182 = scmp.eq.s32.totalorder %s22, 0
      %p183 = por %p181, %p182
      %p184 = scmp.ne.s32.totalorder %s172, %s173
      %p185 = scmp.eq.s32.totalorder %s23, 7
      %p186 = por %p184, %p185
      %p188 = scmp.ne.s32.totalorder %s173, %s187
      %p189 = scmp.eq.s32.totalorder %s23, 0
      %p190 = por %p188, %p189
      %s191 = ssub.s32 %s24, %s36
      %s192 = ssub.s32 %s25, %s32
      %s193 = sor.u32 %s191, %s192
      %p194 = scmp.eq.s32.totalorder %s193, 0
      %s196 = sadd.s32 %s195, 1
      %s197 = scalar_select %p194, %s195, %s196
      %p200 = pneg %p194
      %p201 = scmp.eq.s32.totalorder %s17, 7
      %p202 = por %p200, %p201
      %p203 = scmp.ne.s32.totalorder %s195, %s198
      %p204 = scmp.eq.s32.totalorder %s17, 0
      %p205 = por %p203, %p204
      %p206 = scmp.ne.s32.totalorder %s195, %s198
      %p207 = scmp.eq.s32.totalorder %s22, 7
      %p208 = por %p206, %p207
      %p209 = scmp.ne.s32.totalorder %s198, %s199
      %p210 = scmp.eq.s32.totalorder %s22, 0
      %p211 = por %p209, %p210
      %p212 = scmp.ne.s32.totalorder %s198, %s199
      %p213 = scmp.eq.s32.totalorder %s23, 7
      %p214 = por %p212, %p213
      %p216 = scmp.ne.s32.totalorder %s199, %s215
      %p217 = scmp.eq.s32.totalorder %s23, 0
      %p218 = por %p216, %p217
      %p219 = scmp.le.s32.totalorder 1, %s17
      %p220 = scmp.lt.s32.totalorder %s17, 9
      %p221 = pnand %p219, %p220
      %p222 = pneg %p221
      // Predicated region
      $region9: #{tpu_custom_call.1} parent=5 // pred_check
        _
      $region10: #{tpu_custom_call.1} parent=5 // pred_check_branch
        %224 = sbr.rel (%p221) target = $region12
      $region11: #{tpu_custom_call.1} parent=5 // pred_region
        %s225 = ssub.s32 %s17, 1
        // Predicated region
        $region13: #{tpu_custom_call.1} parent=11 // pred_check
          %p226 = pneg %p78
        $region14: #{tpu_custom_call.1} parent=11 // pred_check_branch
          %228 = sbr.rel (%p226) target = $region16
        $region15: #{tpu_custom_call.1} parent=11 // pred_region
          _
        $region16: #{tpu_custom_call.1} parent=11 // pred_fallthru
          _
        // Predicated region
        $region17: #{tpu_custom_call.1} parent=11 // pred_check
          %p229 = pneg %p99
        $region18: #{tpu_custom_call.1} parent=11 // pred_check_branch
          %231 = sbr.rel (%p229) target = $region20
        $region19: #{tpu_custom_call.1} parent=11 // pred_region
          _
        $region20: #{tpu_custom_call.1} parent=11 // pred_fallthru
          _
        // Predicated region
        $region21: #{tpu_custom_call.1} parent=11 // pred_check
          %p232 = pneg %p120
        $region22: #{tpu_custom_call.1} parent=11 // pred_check_branch
          %234 = sbr.rel (%p232) target = $region24
        $region23: #{tpu_custom_call.1} parent=11 // pred_region
          _
        $region24: #{tpu_custom_call.1} parent=11 // pred_fallthru
          _
        // Predicated region
        $region25: #{tpu_custom_call.1} parent=11 // pred_check
          %p235 = pneg %p141
        $region26: #{tpu_custom_call.1} parent=11 // pred_check_branch
          %237 = sbr.rel (%p235) target = $region28
        $region27: #{tpu_custom_call.1} parent=11 // pred_region
          _
        $region28: #{tpu_custom_call.1} parent=11 // pred_fallthru
          _
        // Predicated region
        $region29: #{tpu_custom_call.1} parent=11 // pred_check
          %p238 = pneg %p162
        $region30: #{tpu_custom_call.1} parent=11 // pred_check_branch
          %240 = sbr.rel (%p238) target = $region32
        $region31: #{tpu_custom_call.1} parent=11 // pred_region
          _
        $region32: #{tpu_custom_call.1} parent=11 // pred_fallthru
          _
        // Predicated region
        $region33: #{tpu_custom_call.1} parent=11 // pred_check
          %p241 = pneg %p183
        $region34: #{tpu_custom_call.1} parent=11 // pred_check_branch
          %243 = sbr.rel (%p241) target = $region36
        $region35: #{tpu_custom_call.1} parent=11 // pred_region
          _
        $region36: #{tpu_custom_call.1} parent=11 // pred_fallthru
          _
      $region12: #{tpu_custom_call.1} parent=5 // pred_fallthru
        _
      %p244 = scmp.lt.s32.totalorder %s17, 8
      // Predicated region
      $region37: #{tpu_custom_call.1} parent=5 // pred_check
        %p245 = pneg %p244
      $region38: #{tpu_custom_call.1} parent=5 // pred_check_branch
        %247 = sbr.rel (%p245) target = $region40
      $region39: #{tpu_custom_call.1} parent=5 // pred_region
        // Predicated region
        $region41: #{tpu_custom_call.1} parent=39 // pred_check
          %p248 = pneg %p51
        $region42: #{tpu_custom_call.1} parent=39 // pred_check_branch
          %250 = sbr.rel (%p248) target = $region44
        $region43: #{tpu_custom_call.1} parent=39 // pred_region
          %s251 = smul.u32 4, %s25
          %p252 = scmp.lt.s32.totalorder %s24, 1
          %s253 = scalar_select %p252, %s24, 1
          %p254 = scmp.lt.s32.totalorder %s251, 15
          %s255 = scalar_select %p254, %s251, 15
          %s256 = smul.addr %s255, 2
          %s257 = smul.addr %s253, 32
          %s258 = sadd.s32 %s256, %s257
          %s259 = smul.addr %s258, 4
          %s260 = scalar_lea.vmem %s0, %s259
          %s261 = smul.u32 4, %s25
        $region44: #{tpu_custom_call.1} parent=39 // pred_fallthru
          _
      $region40: #{tpu_custom_call.1} parent=5 // pred_fallthru
        _
      %p262 = scmp.le.s32.totalorder 1, %s17
      %p263 = scmp.lt.s32.totalorder %s17, 9
      %p264 = pnand %p262, %p263
      %p265 = pneg %p264
      // Predicated region
      $region45: #{tpu_custom_call.1} parent=5 // pred_check
        _
      $region46: #{tpu_custom_call.1} parent=5 // pred_check_branch
        %267 = sbr.rel (%p264) target = $region48
      $region47: #{tpu_custom_call.1} parent=5 // pred_region
        %s268 = ssub.s32 %s17, 1
        %s269 = smul.u32 4, %s27
        %p270 = scmp.lt.s32.totalorder %s26, 1
        %s271 = scalar_select %p270, %s26, 1
        %p272 = scmp.lt.s32.totalorder %s269, 15
        %s273 = scalar_select %p272, %s269, 15
        %s274 = smul.addr %s273, 2
        %s275 = smul.addr %s271, 32
        %s276 = sadd.s32 %s274, %s275
        %s277 = smul.addr %s276, 4
        %s278 = scalar_lea.vmem %s0, %s277
        %p279 = pneg %p57
        %p280 = pneg %p54
        %p281 = pneg %p78
        %p282 = pneg %p75
        %p283 = pneg %p99
        %p284 = pneg %p96
        %p285 = pneg %p120
        %p286 = pneg %p117
        %p287 = pneg %p141
        %p288 = pneg %p138
        %p289 = pneg %p162
        %p290 = pneg %p159
        %p291 = pneg %p183
        %p292 = pneg %p180
        %p293 = pneg %p211
        %p294 = pneg %p208
        %s295 = sand.u32 %s198, 1
        %s296 = scalar_lea.sflag [#allocation6], %s295
        %s297 = sand.u32 %s198, 1
        %s298 = smul.addr %s297, 32
        %s299 = scalar_lea.vmem [#allocation5], %s298
        %s300 = smul.u32 4, %s27
        %p301 = scmp.lt.s32.totalorder %s26, 1
        %s302 = scalar_select %p301, %s26, 1
        %p303 = scmp.lt.s32.totalorder %s300, 15
        %s304 = scalar_select %p303, %s300, 15
        %s305 = smul.addr %s304, 2
        %s306 = smul.addr %s302, 32
        %s307 = sadd.s32 %s305, %s306
        %s308 = smul.addr %s307, 4
        %s309 = scalar_lea.vmem %s0, %s308
        %s310 = smul.u32 4, %s27
        %s311 = smul.u32 4, %s27
        %s313 = smul.u32 %s26, 16
        %s314 = smul.u32 %s27, 4
        %s315 = ssub.s32 %s314, 1
        %p316 = scmp.gt.s32.totalorder %s315, 0
        %s317 = scalar_select %p316, %s315, 0
        %s318 = sadd.s32 %s313, %s317
        %s319 = sadd.s32 %s27, 1
        %s320 = smul.u32 %s319, 4
        %p321 = scmp.lt.s32.totalorder %s320, 15
        %s322 = scalar_select %p321, %s320, 15
        %s323 = sadd.s32 %s313, %s322
        %s324 = smul.u32 %s318, 2
        %s325 = smul.addr %s324, 4
        %s326 = scalar_lea.vmem %s1, %s325
        %p328 = scmp.lt.u32.totalorder 8, 8
        %p329 = pneg %p328
        // Predicated region
        $region49: #{tpu_custom_call.1} parent=47 // pred_check
          _
        $region50: #{tpu_custom_call.1} parent=47 // pred_check_branch
          %331 = sbr.rel (%p328) target = $region52
        $region51: #{tpu_custom_call.1} parent=47 // pred_region
          %s346 = sand.u32 8, 7
          %p347 = scmp.eq.s32.totalorder %s346, 0
          // Predicated region
          $region64: #{tpu_custom_call.1} parent=51 // pred_check
            %p348 = pneg %p347
          $region65: #{tpu_custom_call.1} parent=51 // pred_check_branch
            %350 = sbr.rel (%p348) target = $region67
          $region66: #{tpu_custom_call.1} parent=51 // pred_region
            loop: start=0, step=1, limit=1
            $region68: #{tpu_custom_call.1} parent=66 // loop_pre_header
              _
            $region69: #{tpu_custom_call.1} parent=66 // loop_header
              %s352 = sphi 0, %s356
              %p353 = scmp.ge.s32.totalorder %s352, 1
              %s357 = sphi %s326, %s326
              %s358 = sphi [#allocation2], [#allocation2]
            $region70: #{tpu_custom_call.1} parent=66 // loop_header_branch
              %355 = sbr.rel (%p353) target = $region74
            $region71: #{tpu_custom_call.1} parent=66 // loop_body
              %v359 = vld [vmem:[%s357] sm:$0xff]
              %360 = vst [vmem:[%s358] sm:$0xff] %v359
            $region72: #{tpu_custom_call.1} parent=66 // loop_footer
              %s356 = sadd.s32 1, %s352
            $region73: #{tpu_custom_call.1} parent=66 // loop_footer_branch
              %351 = sbr.rel target = $region69
            $region74: #{tpu_custom_call.1} parent=66 // loop_exit
              _
          $region67: #{tpu_custom_call.1} parent=51 // pred_fallthru
            _
          %p361 = pneg %p347
          // Predicated region
          $region75: #{tpu_custom_call.1} parent=51 // pred_check
            _
          $region76: #{tpu_custom_call.1} parent=51 // pred_check_branch
            %363 = sbr.rel (%p347) target = $region78
          $region77: #{tpu_custom_call.1} parent=51 // pred_region
            %s364 = sand.u32 8, 7
          $region78: #{tpu_custom_call.1} parent=51 // pred_fallthru
            _
        $region52: #{tpu_custom_call.1} parent=47 // pred_fallthru
          _
        // Predicated region
        $region53: #{tpu_custom_call.1} parent=47 // pred_check
          %p332 = pneg %p328
        $region54: #{tpu_custom_call.1} parent=47 // pred_check_branch
          %334 = sbr.rel (%p332) target = $region56
        $region55: #{tpu_custom_call.1} parent=47 // pred_region
          %s335 = sshllo.u32 0, 8
          loop: start=0, step=1, limit=1
          $region57: #{tpu_custom_call.1} parent=55 // loop_pre_header
            _
          $region58: #{tpu_custom_call.1} parent=55 // loop_header
            %s337 = sphi 0, %s341
            %p338 = scmp.ge.s32.totalorder %s337, 1
            %s342 = sphi %s326, %s326
            %s343 = sphi [#allocation2], [#allocation2]
          $region59: #{tpu_custom_call.1} parent=55 // loop_header_branch
            %340 = sbr.rel (%p338) target = $region63
          $region60: #{tpu_custom_call.1} parent=55 // loop_body
            %v344 = vld [vmem:[%s342] sm:%s335]
            %345 = vst [vmem:[%s343] sm:%s335] %v344
          $region61: #{tpu_custom_call.1} parent=55 // loop_footer
            %s341 = sadd.s32 1, %s337
          $region62: #{tpu_custom_call.1} parent=55 // loop_footer_branch
            %336 = sbr.rel target = $region58
          $region63: #{tpu_custom_call.1} parent=55 // loop_exit
            _
        $region56: #{tpu_custom_call.1} parent=47 // pred_fallthru
          _
        // Predicated region
        $region79: #{tpu_custom_call.1} parent=47 // pred_check
          _
        $region80: #{tpu_custom_call.1} parent=47 // pred_check_branch
          %367 = sbr.rel (0) target = $region82
        $region81: #{tpu_custom_call.1} parent=47 // pred_region
          %368 = vsyncadd [#allocation4], 128
        $region82: #{tpu_custom_call.1} parent=47 // pred_fallthru
          _
        %s369 = smul.u32 %s323, 2
        %s370 = smul.addr %s369, 4
        %s371 = scalar_lea.vmem %s1, %s370
        %s372 = scalar_lea.vmem [#allocation2], 8
        %s373 = scalar_lea.sflag [#allocation4], 1
        %p375 = scmp.lt.u32.totalorder 8, 8
        %p376 = pneg %p375
        // Predicated region
        $region83: #{tpu_custom_call.1} parent=47 // pred_check
          _
        $region84: #{tpu_custom_call.1} parent=47 // pred_check_branch
          %378 = sbr.rel (%p375) target = $region86
        $region85: #{tpu_custom_call.1} parent=47 // pred_region
          %s393 = sand.u32 8, 7
          %p394 = scmp.eq.s32.totalorder %s393, 0
          // Predicated region
          $region98: #{tpu_custom_call.1} parent=85 // pred_check
            %p395 = pneg %p394
          $region99: #{tpu_custom_call.1} parent=85 // pred_check_branch
            %397 = sbr.rel (%p395) target = $region101
          $region100: #{tpu_custom_call.1} parent=85 // pred_region
            loop: start=0, step=1, limit=1
            $region102: #{tpu_custom_call.1} parent=100 // loop_pre_header
              _
            $region103: #{tpu_custom_call.1} parent=100 // loop_header
              %s399 = sphi 0, %s403
              %p400 = scmp.ge.s32.totalorder %s399, 1
              %s404 = sphi %s371, %s371
              %s405 = sphi %s372, %s372
            $region104: #{tpu_custom_call.1} parent=100 // loop_header_branch
              %402 = sbr.rel (%p400) target = $region108
            $region105: #{tpu_custom_call.1} parent=100 // loop_body
              %v406 = vld [vmem:[%s404] sm:$0xff]
              %407 = vst [vmem:[%s405] sm:$0xff] %v406
            $region106: #{tpu_custom_call.1} parent=100 // loop_footer
              %s403 = sadd.s32 1, %s399
            $region107: #{tpu_custom_call.1} parent=100 // loop_footer_branch
              %398 = sbr.rel target = $region103
            $region108: #{tpu_custom_call.1} parent=100 // loop_exit
              _
          $region101: #{tpu_custom_call.1} parent=85 // pred_fallthru
            _
          %p408 = pneg %p394
          // Predicated region
          $region109: #{tpu_custom_call.1} parent=85 // pred_check
            _
          $region110: #{tpu_custom_call.1} parent=85 // pred_check_branch
            %410 = sbr.rel (%p394) target = $region112
          $region111: #{tpu_custom_call.1} parent=85 // pred_region
            %s411 = sand.u32 8, 7
          $region112: #{tpu_custom_call.1} parent=85 // pred_fallthru
            _
        $region86: #{tpu_custom_call.1} parent=47 // pred_fallthru
          _
        // Predicated region
        $region87: #{tpu_custom_call.1} parent=47 // pred_check
          %p379 = pneg %p375
        $region88: #{tpu_custom_call.1} parent=47 // pred_check_branch
          %381 = sbr.rel (%p379) target = $region90
        $region89: #{tpu_custom_call.1} parent=47 // pred_region
          %s382 = sshllo.u32 0, 8
          loop: start=0, step=1, limit=1
          $region91: #{tpu_custom_call.1} parent=89 // loop_pre_header
            _
          $region92: #{tpu_custom_call.1} parent=89 // loop_header
            %s384 = sphi 0, %s388
            %p385 = scmp.ge.s32.totalorder %s384, 1
            %s389 = sphi %s371, %s371
            %s390 = sphi %s372, %s372
          $region93: #{tpu_custom_call.1} parent=89 // loop_header_branch
            %387 = sbr.rel (%p385) target = $region97
          $region94: #{tpu_custom_call.1} parent=89 // loop_body
            %v391 = vld [vmem:[%s389] sm:%s382]
            %392 = vst [vmem:[%s390] sm:%s382] %v391
          $region95: #{tpu_custom_call.1} parent=89 // loop_footer
            %s388 = sadd.s32 1, %s384
          $region96: #{tpu_custom_call.1} parent=89 // loop_footer_branch
            %383 = sbr.rel target = $region92
          $region97: #{tpu_custom_call.1} parent=89 // loop_exit
            _
        $region90: #{tpu_custom_call.1} parent=47 // pred_fallthru
          _
        // Predicated region
        $region113: #{tpu_custom_call.1} parent=47 // pred_check
          _
        $region114: #{tpu_custom_call.1} parent=47 // pred_check_branch
          %414 = sbr.rel (0) target = $region116
        $region115: #{tpu_custom_call.1} parent=47 // pred_region
          %415 = vsyncadd %s373, 128
        $region116: #{tpu_custom_call.1} parent=47 // pred_fallthru
          _
        %v416 = vld [vmem:[%s309] sm:$0xf]
        %v417 = vld [vmem:[%s309 + $0x4] sm:$0xf]
        %v418 = vld [vmem:[%s309 + $0x8] sm:$0xf]
        %v419 = vld [vmem:[%s309 + $0xc] sm:$0xf]
        %v420 = vld [vmem:[%s309 + $0x10] sm:$0xf]
        %v421 = vld [vmem:[%s309 + $0x14] sm:$0xf]
        %v422 = vld [vmem:[%s309 + $0x18] sm:$0xf]
        %v423 = vld [vmem:[%s309 + $0x1c] sm:$0xf]
        %v424 = vld [vmem:[%s2] sm:$0xf]
        %v425 = vld [vmem:[%s2 + $0x4] sm:$0xf]
        %v426 = vld [vmem:[%s3] sm:$0x1]
        %v428 = vlaneseq
        %v429 = vshrl.u32 %v428, 7
        %v430 = vsub.s32 0, %v429
        %v431 = vrot.slane %v426, %v430
        %v441 = vunpack.c.l.b16 %v416
        %v442 = vunpack.c.l.b16 %v417
        %v443 = vunpack.c.l.b16 %v418
        %v444 = vunpack.c.l.b16 %v419
        %v445 = vunpack.c.l.b16 %v420
        %v446 = vunpack.c.l.b16 %v421
        %v447 = vunpack.c.l.b16 %v422
        %v448 = vunpack.c.l.b16 %v423
        %v449 = vpack.c.b16 %v442, %v441
        %v450 = vpack.c.b16 %v444, %v443
        %v451 = vpack.c.b16 %v446, %v445
        %v452 = vpack.c.b16 %v448, %v447
        %v455 = vunpack.c.l.b16 %v424
        %v456 = vunpack.c.l.b16 %v425
        %v457 = vpack.c.b16 %v456, %v455
        %vm459 = vcmask 130048
        %v461 = vsel %vm459, %v449, 0
        %v464 = vsel %vm459, %v450, 0
        %v467 = vsel %vm459, %v451, 0
        %v470 = vsel %vm459, %v452, 0
        %472 = vmatprep.subr.bf16.mxu0 0
        %473 = vmatpush1.bf16.msra.mxu0 %v457
        %474 = vmatprep.subr.bf16.mxu0 0
        %475 = vmatpush1.bf16.msra.mxu0 0
        %476 = vmatprep.subr.bf16.mxu0 0
        %477 = vmatpush1.bf16.msra.mxu0 0
        %478 = vmatprep.subr.bf16.mxu0 0
        %479 = vmatpush1.bf16.msra.mxu0 0
        %480 = vmatprep.subr.bf16.mxu0 0
        %481 = vmatpush1.bf16.msra.mxu0 0
        %482 = vmatprep.subr.bf16.mxu0 0
        %483 = vmatpush1.bf16.msra.mxu0 0
        %484 = vmatprep.subr.bf16.mxu0 0
        %485 = vmatpush1.bf16.msra.mxu0 0
        %486 = vmatprep.subr.bf16.mxu0 0
        %487 = vmatpush1.bf16.msra.mxu0 0
        %488 = vmatprep.subr.bf16.mxu0 0
        %489 = vmatpush1.bf16.msra.mxu0 0
        %490 = vmatprep.subr.bf16.mxu0 0
        %491 = vmatpush1.bf16.msra.mxu0 0
        %492 = vmatprep.subr.bf16.mxu0 0
        %493 = vmatpush1.bf16.msra.mxu0 0
        %494 = vmatprep.subr.bf16.mxu0 0
        %495 = vmatpush1.bf16.msra.mxu0 0
        %496 = vmatprep.subr.bf16.mxu0 0
        %497 = vmatpush1.bf16.msra.mxu0 0
        %498 = vmatprep.subr.bf16.mxu0 0
        %499 = vmatpush1.bf16.msra.mxu0 0
        %500 = vmatprep.subr.bf16.mxu0 0
        %501 = vmatpush1.bf16.msra.mxu0 0
        %502 = vmatprep.subr.bf16.mxu0 0
        %503 = vmatpush1.bf16.msra.mxu0 0
        %504 = vmatprep.mubr.bf16.mxu0 0
        %505 = vmatmul.mubr.bf16.gmra.mrb[0].mxu0 %v461
        %v506 = vpop.f32.mrb[0].mxu0
        %v507 = vadd.f32 %v431, %v506
        %v508 = vpop.f32.mrb[0].mxu0
        %v509 = vpop.f32.mrb[0].mxu0
        %v510 = vadd.f32 %v431, %v509
        %v511 = vpop.f32.mrb[0].mxu0
        %512 = vmatprep.mubr.bf16.mxu0 0
        %513 = vmatmul.mubr.bf16.gmra.mrb[0].mxu0 %v464
        %v514 = vpop.f32.mrb[0].mxu0
        %v515 = vadd.f32 %v431, %v514
        %v516 = vpop.f32.mrb[0].mxu0
        %v517 = vpop.f32.mrb[0].mxu0
        %v518 = vadd.f32 %v431, %v517
        %v519 = vpop.f32.mrb[0].mxu0
        %520 = vmatprep.mubr.bf16.mxu0 0
        %521 = vmatmul.mubr.bf16.gmra.mrb[0].mxu0 %v467
        %v522 = vpop.f32.mrb[0].mxu0
        %v523 = vadd.f32 %v431, %v522
        %v524 = vpop.f32.mrb[0].mxu0
        %v525 = vpop.f32.mrb[0].mxu0
        %v526 = vadd.f32 %v431, %v525
        %v527 = vpop.f32.mrb[0].mxu0
        %528 = vmatprep.mubr.bf16.mxu0 0
        %529 = vmatmul.mubr.bf16.gmra.mrb[0].mxu0 %v470
        %v530 = vpop.f32.mrb[0].mxu0
        %v531 = vadd.f32 %v431, %v530
        %v532 = vpop.f32.mrb[0].mxu0
        %v533 = vpop.f32.mrb[0].mxu0
        %v534 = vadd.f32 %v431, %v533
        %v535 = vpop.f32.mrb[0].mxu0
        %536 = vdwg.mxu0
        %v537 = vmax.f32 %v507, 0.0
        %v538 = vmax.f32 %v510, 0.0
        %v539 = vmax.f32 %v515, 0.0
        %v540 = vmax.f32 %v518, 0.0
        %v541 = vmax.f32 %v523, 0.0
        %v542 = vmax.f32 %v526, 0.0
        %v543 = vmax.f32 %v531, 0.0
        %v544 = vmax.f32 %v534, 0.0
        %v545 = vpack.c.bf16 %v538, %v537
        %v546 = vpack.c.bf16 %v540, %v539
        %v547 = vpack.c.bf16 %v542, %v541
        %v548 = vpack.c.bf16 %v544, %v543
        %v553 = vunpack.c.l.b16 %v545
        %v554 = vunpack.c.h.b16 %v545
        %v555 = vunpack.c.l.b16 %v546
        %v556 = vunpack.c.h.b16 %v546
        %v557 = vunpack.c.l.b16 %v547
        %v558 = vunpack.c.h.b16 %v547
        %v559 = vunpack.c.l.b16 %v548
        %v560 = vunpack.c.h.b16 %v548
        %v561 = vpack.c.b16 %v553, %v553
        %v562 = vpack.c.b16 %v554, %v554
        %v563 = vpack.c.b16 %v555, %v555
        %v564 = vpack.c.b16 %v556, %v556
        %v565 = vpack.c.b16 %v557, %v557
        %v566 = vpack.c.b16 %v558, %v558
        %v567 = vpack.c.b16 %v559, %v559
        %v568 = vpack.c.b16 %v560, %v560
        %vm569 = vsmask.f32 256
        %vm570 = vsmask.f32 4368
        %vm571 = vmor %vm569, %vm570
        %v573 = vshrl.u32 %v561, 16
        %v575 = vrot.slane %v573, 7
        %v576 = vshll.u32 %v561, 16
        %v578 = vor.u32 %v575, %v576
        %v579 = vrot.slane %v575, 4
        %v581 = vshrl.u32 %v562, 16
        %v583 = vrot.slane %v581, 7
        %v584 = vshll.u32 %v562, 16
        %v586 = vor.u32 %v583, %v584
        %v587 = vsel %vm571, %v579, %v586
        %v588 = vrot.slane %v583, 4
        %v590 = vshrl.u32 %v563, 16
        %v592 = vrot.slane %v590, 7
        %v593 = vshll.u32 %v563, 16
        %v595 = vor.u32 %v592, %v593
        %v596 = vrot.slane %v592, 4
        %v598 = vshrl.u32 %v564, 16
        %v600 = vrot.slane %v598, 7
        %v601 = vshll.u32 %v564, 16
        %v603 = vor.u32 %v600, %v601
        %v604 = vsel %vm571, %v596, %v603
        %v605 = vrot.slane %v600, 4
        %v607 = vshrl.u32 %v565, 16
        %v609 = vrot.slane %v607, 7
        %v610 = vshll.u32 %v565, 16
        %v612 = vor.u32 %v609, %v610
        %v613 = vrot.slane %v609, 4
        %v615 = vshrl.u32 %v566, 16
        %v617 = vrot.slane %v615, 7
        %v618 = vshll.u32 %v566, 16
        %v620 = vor.u32 %v617, %v618
        %v621 = vsel %vm571, %v613, %v620
        %v622 = vrot.slane %v617, 4
        %v624 = vshrl.u32 %v567, 16
        %v626 = vrot.slane %v624, 7
        %v627 = vshll.u32 %v567, 16
        %v629 = vor.u32 %v626, %v627
        %v630 = vrot.slane %v626, 4
        %v632 = vshrl.u32 %v568, 16
        %v634 = vrot.slane %v632, 7
        %v635 = vshll.u32 %v568, 16
        %v637 = vor.u32 %v634, %v635
        %v638 = vsel %vm571, %v630, %v637
        %v639 = vrot.slane %v634, 4
        %s652 = scalar_lea.vmem [#allocation3], 12
        %vm653 = vcmask 27648
        %vm654 = vsmask.f32 7938
        %vm655 = vmand %vm653, %vm654
        %v656 = vld [vmem:[%s652] sm:$0xf]
        %v657 = vsel %vm655, %v578, %v656
        %658 = vst [vmem:[%s652] sm:$0xf] %v657
        %vm659 = vcmask 27648
        %660 = vst.msk [vmem:[%s652 + $0x4] sm:$0xf] %vm659, %v587
        %vm661 = vcmask 24576
        %vm662 = vmand %vm661, %vm569
        %v663 = vld [vmem:[%s652 + $0x8] sm:$0x1]
        %v664 = vsel %vm662, %v588, %v663
        %665 = vst [vmem:[%s652 + $0x8] sm:$0x1] %v664
        %v666 = vld [vmem:[%s652 + $0xc] sm:$0xf]
        %v667 = vsel %vm655, %v595, %v666
        %668 = vst [vmem:[%s652 + $0xc] sm:$0xf] %v667
        %669 = vst.msk [vmem:[%s652 + $0x10] sm:$0xf] %vm659, %v604
        %v670 = vld [vmem:[%s652 + $0x14] sm:$0x1]
        %v671 = vsel %vm662, %v605, %v670
        %672 = vst [vmem:[%s652 + $0x14] sm:$0x1] %v671
        %v673 = vld [vmem:[%s652 + $0x18] sm:$0xf]
        %v674 = vsel %vm655, %v612, %v673
        %675 = vst [vmem:[%s652 + $0x18] sm:$0xf] %v674
        %676 = vst.msk [vmem:[%s652 + $0x1c] sm:$0xf] %vm659, %v621
        %v677 = vld [vmem:[%s652 + $0x20] sm:$0x1]
        %v678 = vsel %vm662, %v622, %v677
        %679 = vst [vmem:[%s652 + $0x20] sm:$0x1] %v678
        %v680 = vld [vmem:[%s652 + $0x24] sm:$0xf]
        %v681 = vsel %vm655, %v629, %v680
        %682 = vst [vmem:[%s652 + $0x24] sm:$0xf] %v681
        %683 = vst.msk [vmem:[%s652 + $0x28] sm:$0xf] %vm659, %v638
        %v684 = vld [vmem:[%s652 + $0x2c] sm:$0x1]
        %v685 = vsel %vm662, %v639, %v684
        %686 = vst [vmem:[%s652 + $0x2c] sm:$0x1] %v685
        %p687 = scmp.eq.s32.totalorder %s27, 0
        // Predicated region
        $region117: #{tpu_custom_call.1} parent=47 // pred_check
          %p688 = pneg %p687
        $region118: #{tpu_custom_call.1} parent=47 // pred_check_branch
          %690 = sbr.rel (%p688) target = $region120
        $region119: #{tpu_custom_call.1} parent=47 // pred_region
          %v691 = vld [vmem:[#allocation3] sm:$0x1]
          %v692 = vsel %vm662, 0, %v691
          %693 = vst [vmem:[#allocation3] sm:$0x1] %v692
          %v694 = vld [vmem:[#allocation3 + $0xc] sm:$0x1]
          %v695 = vsel %vm662, 0, %v694
          %696 = vst [vmem:[#allocation3 + $0xc] sm:$0x1] %v695
          %v697 = vld [vmem:[#allocation3 + $0x18] sm:$0x1]
          %v698 = vsel %vm662, 0, %v697
          %699 = vst [vmem:[#allocation3 + $0x18] sm:$0x1] %v698
          %v700 = vld [vmem:[#allocation3 + $0x24] sm:$0x1]
          %v701 = vsel %vm662, 0, %v700
          %702 = vst [vmem:[#allocation3 + $0x24] sm:$0x1] %v701
          %v703 = vld [vmem:[#allocation3 + $0x30] sm:$0x1]
          %v704 = vsel %vm662, 0, %v703
          %705 = vst [vmem:[#allocation3 + $0x30] sm:$0x1] %v704
          %v706 = vld [vmem:[#allocation3 + $0x3c] sm:$0x1]
          %v707 = vsel %vm662, 0, %v706
          %708 = vst [vmem:[#allocation3 + $0x3c] sm:$0x1] %v707
          %vm709 = vmand %vm661, %vm654
          %v710 = vld [vmem:[#allocation3 + $0x8] sm:$0x1]
          %v711 = vsel %vm709, 0, %v710
          %712 = vst [vmem:[#allocation3 + $0x8] sm:$0x1] %v711
          %v713 = vld [vmem:[#allocation3 + $0x14] sm:$0x1]
          %v714 = vsel %vm709, 0, %v713
          %715 = vst [vmem:[#allocation3 + $0x14] sm:$0x1] %v714
          %v716 = vld [vmem:[#allocation3 + $0x20] sm:$0x1]
          %v717 = vsel %vm709, 0, %v716
          %718 = vst [vmem:[#allocation3 + $0x20] sm:$0x1] %v717
          %v719 = vld [vmem:[#allocation3 + $0x2c] sm:$0x1]
          %v720 = vsel %vm709, 0, %v719
          %721 = vst [vmem:[#allocation3 + $0x2c] sm:$0x1] %v720
          %v722 = vld [vmem:[#allocation3 + $0x38] sm:$0x1]
          %v723 = vsel %vm709, 0, %v722
          %724 = vst [vmem:[#allocation3 + $0x38] sm:$0x1] %v723
          %v725 = vld [vmem:[#allocation3 + $0x44] sm:$0x1]
          %v726 = vsel %vm709, 0, %v725
          %727 = vst [vmem:[#allocation3 + $0x44] sm:$0x1] %v726
        $region120: #{tpu_custom_call.1} parent=47 // pred_fallthru
          _
        %s728 = smul.u32 4, 1
        %s729 = smul.u32 %s728, 2
        %s730 = smul.u32 %s729, 1
        %s731 = sshll.u32 %s730, 4
        %732 = dma.done [#allocation4], %s731
        %s733 = sshll.u32 %s730, 4
        %734 = dma.done %s373, %s733
        %v735 = vld [vmem:[#allocation2] sm:$0xff]
        %v736 = vld [vmem:[#allocation2 + $0x8] sm:$0xff]
        %v737 = vld [vmem:[%s2] sm:$0xf]
        %v738 = vld [vmem:[%s2 + $0x4] sm:$0xf]
        %v739 = vld [vmem:[%s3] sm:$0x1]
        %v741 = vlaneseq
        %v742 = vshrl.u32 %v741, 7
        %v743 = vsub.s32 0, %v742
        %v744 = vrot.slane %v739, %v743
        %v748 = vunpack.c.l.b16 %v737
        %v749 = vunpack.c.l.b16 %v738
        %v750 = vpack.c.b16 %v749, %v748
        %v753 = vsel %vm459, %v735, 0
        %v756 = vsel %vm459, %v736, 0
        %758 = vmatprep.subr.bf16.mxu0 0
        %759 = vmatpush1.bf16.msra.mxu0 %v750
        %760 = vmatprep.subr.bf16.mxu0 0
        %761 = vmatpush1.bf16.msra.mxu0 0
        %762 = vmatprep.subr.bf16.mxu0 0
        %763 = vmatpush1.bf16.msra.mxu0 0
        %764 = vmatprep.subr.bf16.mxu0 0
        %765 = vmatpush1.bf16.msra.mxu0 0
        %766 = vmatprep.subr.bf16.mxu0 0
        %767 = vmatpush1.bf16.msra.mxu0 0
        %768 = vmatprep.subr.bf16.mxu0 0
        %769 = vmatpush1.bf16.msra.mxu0 0
        %770 = vmatprep.subr.bf16.mxu0 0
        %771 = vmatpush1.bf16.msra.mxu0 0
        %772 = vmatprep.subr.bf16.mxu0 0
        %773 = vmatpush1.bf16.msra.mxu0 0
        %774 = vmatprep.subr.bf16.mxu0 0
        %775 = vmatpush1.bf16.msra.mxu0 0
        %776 = vmatprep.subr.bf16.mxu0 0
        %777 = vmatpush1.bf16.msra.mxu0 0
        %778 = vmatprep.subr.bf16.mxu0 0
        %779 = vmatpush1.bf16.msra.mxu0 0
        %780 = vmatprep.subr.bf16.mxu0 0
        %781 = vmatpush1.bf16.msra.mxu0 0
        %782 = vmatprep.subr.bf16.mxu0 0
        %783 = vmatpush1.bf16.msra.mxu0 0
        %784 = vmatprep.subr.bf16.mxu0 0
        %785 = vmatpush1.bf16.msra.mxu0 0
        %786 = vmatprep.subr.bf16.mxu0 0
        %787 = vmatpush1.bf16.msra.mxu0 0
        %788 = vmatprep.subr.bf16.mxu0 0
        %789 = vmatpush1.bf16.msra.mxu0 0
        %790 = vmatprep.mubr.bf16.mxu0 0
        %791 = vmatmul.mubr.bf16.gmra.mrb[0].mxu0 %v753
        %v792 = vpop.f32.mrb[0].mxu0
        %v793 = vadd.f32 %v744, %v792
        %v794 = vpop.f32.mrb[0].mxu0
        %v795 = vpop.f32.mrb[0].mxu0
        %v796 = vadd.f32 %v744, %v795
        %v797 = vpop.f32.mrb[0].mxu0
        %798 = vmatprep.mubr.bf16.mxu0 0
        %799 = vmatmul.mubr.bf16.gmra.mrb[0].mxu0 %v756
        %v800 = vpop.f32.mrb[0].mxu0
        %v801 = vadd.f32 %v744, %v800
        %v802 = vpop.f32.mrb[0].mxu0
        %v803 = vpop.f32.mrb[0].mxu0
        %v804 = vadd.f32 %v744, %v803
        %v805 = vpop.f32.mrb[0].mxu0
        %806 = vdwg.mxu0
        %v807 = vmax.f32 %v793, 0.0
        %v808 = vmax.f32 %v796, 0.0
        %v809 = vmax.f32 %v801, 0.0
        %v810 = vmax.f32 %v804, 0.0
        %v811 = vpack.c.bf16 %v808, %v807
        %v812 = vpack.c.bf16 %v810, %v809
        %v814 = vunpack.c.l.b16 %v811
        %v815 = vunpack.c.h.b16 %v811
        %v816 = vpack.c.b16 %v814, %v814
        %v817 = vpack.c.b16 %v815, %v815
        %v819 = vshrl.u32 %v816, 16
        %v821 = vrot.slane %v819, 7
        %v822 = vshll.u32 %v816, 16
        %v824 = vor.u32 %v821, %v822
        %v825 = vrot.slane %v821, 4
        %v827 = vshrl.u32 %v817, 16
        %v829 = vrot.slane %v827, 7
        %v830 = vshll.u32 %v817, 16
        %v832 = vor.u32 %v829, %v830
        %v833 = vsel %vm571, %v825, %v832
        %v834 = vrot.slane %v829, 4
        %v838 = vld [vmem:[#allocation3] sm:$0xf]
        %v839 = vsel %vm655, %v824, %v838
        %840 = vst [vmem:[#allocation3] sm:$0xf] %v839
        %841 = vst.msk [vmem:[#allocation3 + $0x4] sm:$0xf] %vm659, %v833
        %v842 = vld [vmem:[#allocation3 + $0x8] sm:$0x1]
        %v843 = vsel %vm662, %v834, %v842
        %844 = vst [vmem:[#allocation3 + $0x8] sm:$0x1] %v843
        %v846 = vunpack.c.l.b16 %v812
        %v847 = vunpack.c.h.b16 %v812
        %v848 = vpack.c.b16 %v846, %v846
        %v849 = vpack.c.b16 %v847, %v847
        %v851 = vshrl.u32 %v848, 16
        %v853 = vrot.slane %v851, 7
        %v854 = vshll.u32 %v848, 16
        %v856 = vor.u32 %v853, %v854
        %v857 = vrot.slane %v853, 4
        %v859 = vshrl.u32 %v849, 16
        %v861 = vrot.slane %v859, 7
        %v862 = vshll.u32 %v849, 16
        %v864 = vor.u32 %v861, %v862
        %v865 = vsel %vm571, %v857, %v864
        %v866 = vrot.slane %v861, 4
        %s870 = scalar_lea.vmem [#allocation3], 60
        %v871 = vld [vmem:[%s870] sm:$0xf]
        %v872 = vsel %vm655, %v856, %v871
        %873 = vst [vmem:[%s870] sm:$0xf] %v872
        %874 = vst.msk [vmem:[%s870 + $0x4] sm:$0xf] %vm659, %v865
        %v875 = vld [vmem:[%s870 + $0x8] sm:$0x1]
        %v876 = vsel %vm662, %v866, %v875
        %877 = vst [vmem:[%s870 + $0x8] sm:$0x1] %v876
        // Predicated region
        $region121: #{tpu_custom_call.1} parent=47 // pred_check
          %p878 = pneg %p687
        $region122: #{tpu_custom_call.1} parent=47 // pred_check_branch
          %880 = sbr.rel (%p878) target = $region124
        $region123: #{tpu_custom_call.1} parent=47 // pred_region
          %881 = vst.msk [vmem:[#allocation3] sm:$0xf] %vm659, 0
          %882 = vst.msk [vmem:[#allocation3 + $0x4] sm:$0xf] %vm659, 0
          %vm883 = vcmask 24576
          %884 = vst.msk [vmem:[#allocation3 + $0x8] sm:$0x1] %vm883, 0
        $region124: #{tpu_custom_call.1} parent=47 // pred_fallthru
          _
        %p885 = scmp.eq.s32.totalorder %s27, 3
        // Predicated region
        $region125: #{tpu_custom_call.1} parent=47 // pred_check
          %p886 = pneg %p885
        $region126: #{tpu_custom_call.1} parent=47 // pred_check_branch
          %888 = sbr.rel (%p886) target = $region128
        $region127: #{tpu_custom_call.1} parent=47 // pred_region
          %889 = vst.msk [vmem:[%s870] sm:$0xf] %vm659, 0
          %890 = vst.msk [vmem:[%s870 + $0x4] sm:$0xf] %vm659, 0
          %vm891 = vcmask 24576
          %892 = vst.msk [vmem:[%s870 + $0x8] sm:$0x1] %vm891, 0
        $region128: #{tpu_custom_call.1} parent=47 // pred_fallthru
          _
        %v893 = vld [vmem:[#allocation3] sm:$0xf]
        %v894 = vld [vmem:[#allocation3 + $0x4] sm:$0xf]
        %v895 = vld [vmem:[#allocation3 + $0xc] sm:$0xf]
        %v896 = vld [vmem:[#allocation3 + $0x10] sm:$0xf]
        %v897 = vld [vmem:[#allocation3 + $0x18] sm:$0xf]
        %v898 = vld [vmem:[#allocation3 + $0x1c] sm:$0xf]
        %v899 = vld [vmem:[#allocation3 + $0x24] sm:$0xf]
        %v900 = vld [vmem:[#allocation3 + $0x28] sm:$0xf]
        %v901 = vld [vmem:[%s4] sm:$0x3]
        %v902 = vld [vmem:[#allocation3 + $0x8] sm:$0x1]
        %v903 = vld [vmem:[#allocation3 + $0x14] sm:$0x1]
        %v904 = vld [vmem:[#allocation3 + $0x20] sm:$0x1]
        %v905 = vld [vmem:[#allocation3 + $0x2c] sm:$0x1]
        %vm906 = vsmask.f32 3328
        %vm907 = vsmask.f32 7440
        %vm908 = vmor %vm906, %vm907
        %v910 = vshrl.u32 %v893, 16
        %v912 = vrot.slane %v910, 4
        %v913 = vshll.u32 %v893, 16
        %v915 = vrot.slane %v913, 5
        %v916 = vor.u32 %v912, %v915
        %v917 = vrot.slane %v916, 4
        %v919 = vshll.u32 %v894, 16
        %v921 = vrot.slane %v919, 5
        %v922 = vsel %vm908, %v917, %v921
        %v923 = vshrl.u32 %v894, 16
        %v925 = vrot.slane %v923, 4
        %v926 = vor.u32 %v925, %v921
        %v927 = vrot.slane %v926, 4
        %v929 = vshll.u32 %v902, 16
        %v931 = vrot.slane %v929, 5
        %v932 = vsel %vm908, %v927, %v931
        %v934 = vshrl.u32 %v895, 16
        %v936 = vrot.slane %v934, 4
        %v937 = vshll.u32 %v895, 16
        %v939 = vrot.slane %v937, 5
        %v940 = vor.u32 %v936, %v939
        %v941 = vrot.slane %v940, 4
        %v943 = vshll.u32 %v896, 16
        %v945 = vrot.slane %v943, 5
        %v946 = vsel %vm908, %v941, %v945
        %v947 = vshrl.u32 %v896, 16
        %v949 = vrot.slane %v947, 4
        %v950 = vor.u32 %v949, %v945
        %v951 = vrot.slane %v950, 4
        %v953 = vshll.u32 %v903, 16
        %v955 = vrot.slane %v953, 5
        %v956 = vsel %vm908, %v951, %v955
        %v958 = vshrl.u32 %v897, 16
        %v960 = vrot.slane %v958, 4
        %v961 = vshll.u32 %v897, 16
        %v963 = vrot.slane %v961, 5
        %v964 = vor.u32 %v960, %v963
        %v965 = vrot.slane %v964, 4
        %v967 = vshll.u32 %v898, 16
        %v969 = vrot.slane %v967, 5
        %v970 = vsel %vm908, %v965, %v969
        %v971 = vshrl.u32 %v898, 16
        %v973 = vrot.slane %v971, 4
        %v974 = vor.u32 %v973, %v969
        %v975 = vrot.slane %v974, 4
        %v977 = vshll.u32 %v904, 16
        %v979 = vrot.slane %v977, 5
        %v980 = vsel %vm908, %v975, %v979
        %v982 = vshrl.u32 %v899, 16
        %v984 = vrot.slane %v982, 4
        %v985 = vshll.u32 %v899, 16
        %v987 = vrot.slane %v985, 5
        %v988 = vor.u32 %v984, %v987
        %v989 = vrot.slane %v988, 4
        %v991 = vshll.u32 %v900, 16
        %v993 = vrot.slane %v991, 5
        %v994 = vsel %vm908, %v989, %v993
        %v995 = vshrl.u32 %v900, 16
        %v997 = vrot.slane %v995, 4
        %v998 = vor.u32 %v997, %v993
        %v999 = vrot.slane %v998, 4
        %v1001 = vshll.u32 %v905, 16
        %v1003 = vrot.slane %v1001, 5
        %v1004 = vsel %vm908, %v999, %v1003
        %s1005 = scalar_lea.vmem %s4, 2
        %v1006 = vld [vmem:[%s1005] sm:$0x3]
        %v1007 = vunpack.c.l.b16 %v922
        %v1008 = vunpack.c.l.b16 %v932
        %v1009 = vunpack.c.l.b16 %v946
        %v1010 = vunpack.c.l.b16 %v956
        %v1011 = vunpack.c.l.b16 %v970
        %v1012 = vunpack.c.l.b16 %v980
        %v1013 = vunpack.c.l.b16 %v994
        %v1014 = vunpack.c.l.b16 %v1004
        %v1015 = vpack.c.b16 %v1008, %v1007
        %v1016 = vpack.c.b16 %v1010, %v1009
        %v1017 = vpack.c.b16 %v1012, %v1011
        %v1018 = vpack.c.b16 %v1014, %v1013
        %vm1019 = vcmask 31744
        %v1021 = vsel %vm1019, %v1015, 0
        %v1024 = vsel %vm1019, %v1016, 0
        %v1027 = vsel %vm1019, %v1017, 0
        %v1030 = vsel %vm1019, %v1018, 0
        %vm1032 = vcmask 1041408
        %v1034 = vsel %vm1032, %v1006, 0
        %1036 = vmatprep.subr.bf16.mxu0 0
        %1037 = vmatpush1.bf16.msra.mxu0 %v1034
        %1038 = vmatprep.subr.bf16.mxu0 0
        %1039 = vmatpush1.bf16.msra.mxu0 0
        %1040 = vmatprep.subr.bf16.mxu0 0
        %1041 = vmatpush1.bf16.msra.mxu0 0
        %1042 = vmatprep.subr.bf16.mxu0 0
        %1043 = vmatpush1.bf16.msra.mxu0 0
        %1044 = vmatprep.subr.bf16.mxu0 0
        %1045 = vmatpush1.bf16.msra.mxu0 0
        %1046 = vmatprep.subr.bf16.mxu0 0
        %1047 = vmatpush1.bf16.msra.mxu0 0
        %1048 = vmatprep.subr.bf16.mxu0 0
        %1049 = vmatpush1.bf16.msra.mxu0 0
        %1050 = vmatprep.subr.bf16.mxu0 0
        %1051 = vmatpush1.bf16.msra.mxu0 0
        %1052 = vmatprep.subr.bf16.mxu0 0
        %1053 = vmatpush1.bf16.msra.mxu0 0
        %1054 = vmatprep.subr.bf16.mxu0 0
        %1055 = vmatpush1.bf16.msra.mxu0 0
        %1056 = vmatprep.subr.bf16.mxu0 0
        %1057 = vmatpush1.bf16.msra.mxu0 0
        %1058 = vmatprep.subr.bf16.mxu0 0
        %1059 = vmatpush1.bf16.msra.mxu0 0
        %1060 = vmatprep.subr.bf16.mxu0 0
        %1061 = vmatpush1.bf16.msra.mxu0 0
        %1062 = vmatprep.subr.bf16.mxu0 0
        %1063 = vmatpush1.bf16.msra.mxu0 0
        %1064 = vmatprep.subr.bf16.mxu0 0
        %1065 = vmatpush1.bf16.msra.mxu0 0
        %1066 = vmatprep.subr.bf16.mxu0 0
        %1067 = vmatpush1.bf16.msra.mxu0 0
        %1068 = vmatprep.mubr.bf16.mxu0 0
        %1069 = vmatmul.mubr.bf16.gmra.mrb[0].mxu0 %v1021
        %v1070 = vpop.f32.mrb[0].mxu0
        %v1071 = vadd.f32 0.0, %v1070
        %v1072 = vpop.f32.mrb[0].mxu0
        %v1073 = vpop.f32.mrb[0].mxu0
        %v1074 = vadd.f32 0.0, %v1073
        %v1075 = vpop.f32.mrb[0].mxu0
        %1076 = vmatprep.mubr.bf16.mxu0 0
        %1077 = vmatmul.mubr.bf16.gmra.mrb[0].mxu0 %v1024
        %v1078 = vpop.f32.mrb[0].mxu0
        %v1079 = vadd.f32 0.0, %v1078
        %v1080 = vpop.f32.mrb[0].mxu0
        %v1081 = vpop.f32.mrb[0].mxu0
        %v1082 = vadd.f32 0.0, %v1081
        %v1083 = vpop.f32.mrb[0].mxu0
        %1084 = vmatprep.mubr.bf16.mxu0 0
        %1085 = vmatmul.mubr.bf16.gmra.mrb[0].mxu0 %v1027
        %v1086 = vpop.f32.mrb[0].mxu0
        %v1087 = vadd.f32 0.0, %v1086
        %v1088 = vpop.f32.mrb[0].mxu0
        %v1089 = vpop.f32.mrb[0].mxu0
        %v1090 = vadd.f32 0.0, %v1089
        %v1091 = vpop.f32.mrb[0].mxu0
        %1092 = vmatprep.mubr.bf16.mxu0 0
        %1093 = vmatmul.mubr.bf16.gmra.mrb[0].mxu0 %v1030
        %v1094 = vpop.f32.mrb[0].mxu0
        %v1095 = vadd.f32 0.0, %v1094
        %v1096 = vpop.f32.mrb[0].mxu0
        %v1097 = vpop.f32.mrb[0].mxu0
        %v1098 = vadd.f32 0.0, %v1097
        %v1099 = vpop.f32.mrb[0].mxu0
        %1100 = vdwg.mxu0
        %v1109 = vunpack.c.l.b16 %v893
        %v1110 = vunpack.c.l.b16 %v894
        %v1111 = vunpack.c.l.b16 %v895
        %v1112 = vunpack.c.l.b16 %v896
        %v1113 = vunpack.c.l.b16 %v897
        %v1114 = vunpack.c.l.b16 %v898
        %v1115 = vunpack.c.l.b16 %v899
        %v1116 = vunpack.c.l.b16 %v900
        %v1117 = vpack.c.b16 %v1110, %v1109
        %v1118 = vpack.c.b16 %v1112, %v1111
        %v1119 = vpack.c.b16 %v1114, %v1113
        %v1120 = vpack.c.b16 %v1116, %v1115
        %v1122 = vsel %vm1019, %v1117, 0
        %v1125 = vsel %vm1019, %v1118, 0
        %v1128 = vsel %vm1019, %v1119, 0
        %v1131 = vsel %vm1019, %v1120, 0
        %v1134 = vsel %vm1032, %v901, 0
        %1136 = vmatprep.subr.bf16.mxu0 0
        %1137 = vmatpush1.bf16.msra.mxu0 %v1134
        %1138 = vmatprep.subr.bf16.mxu0 0
        %1139 = vmatpush1.bf16.msra.mxu0 0
        %1140 = vmatprep.subr.bf16.mxu0 0
        %1141 = vmatpush1.bf16.msra.mxu0 0
        %1142 = vmatprep.subr.bf16.mxu0 0
        %1143 = vmatpush1.bf16.msra.mxu0 0
        %1144 = vmatprep.subr.bf16.mxu0 0
        %1145 = vmatpush1.bf16.msra.mxu0 0
        %1146 = vmatprep.subr.bf16.mxu0 0
        %1147 = vmatpush1.bf16.msra.mxu0 0
        %1148 = vmatprep.subr.bf16.mxu0 0
        %1149 = vmatpush1.bf16.msra.mxu0 0
        %1150 = vmatprep.subr.bf16.mxu0 0
        %1151 = vmatpush1.bf16.msra.mxu0 0
        %1152 = vmatprep.subr.bf16.mxu0 0
        %1153 = vmatpush1.bf16.msra.mxu0 0
        %1154 = vmatprep.subr.bf16.mxu0 0
        %1155 = vmatpush1.bf16.msra.mxu0 0
        %1156 = vmatprep.subr.bf16.mxu0 0
        %1157 = vmatpush1.bf16.msra.mxu0 0
        %1158 = vmatprep.subr.bf16.mxu0 0
        %1159 = vmatpush1.bf16.msra.mxu0 0
        %1160 = vmatprep.subr.bf16.mxu0 0
        %1161 = vmatpush1.bf16.msra.mxu0 0
        %1162 = vmatprep.subr.bf16.mxu0 0
        %1163 = vmatpush1.bf16.msra.mxu0 0
        %1164 = vmatprep.subr.bf16.mxu0 0
        %1165 = vmatpush1.bf16.msra.mxu0 0
        %1166 = vmatprep.subr.bf16.mxu0 0
        %1167 = vmatpush1.bf16.msra.mxu0 0
        %1168 = vmatprep.mubr.bf16.mxu0 0
        %1169 = vmatmul.mubr.bf16.gmra.mrb[0].mxu0 %v1122
        %v1170 = vpop.f32.mrb[0].mxu0
        %v1171 = vadd.f32 %v1071, %v1170
        %v1172 = vpop.f32.mrb[0].mxu0
        %v1173 = vpop.f32.mrb[0].mxu0
        %v1174 = vadd.f32 %v1074, %v1173
        %v1175 = vpop.f32.mrb[0].mxu0
        %1176 = vmatprep.mubr.bf16.mxu0 0
        %1177 = vmatmul.mubr.bf16.gmra.mrb[0].mxu0 %v1125
        %v1178 = vpop.f32.mrb[0].mxu0
        %v1179 = vadd.f32 %v1079, %v1178
        %v1180 = vpop.f32.mrb[0].mxu0
        %v1181 = vpop.f32.mrb[0].mxu0
        %v1182 = vadd.f32 %v1082, %v1181
        %v1183 = vpop.f32.mrb[0].mxu0
        %1184 = vmatprep.mubr.bf16.mxu0 0
        %1185 = vmatmul.mubr.bf16.gmra.mrb[0].mxu0 %v1128
        %v1186 = vpop.f32.mrb[0].mxu0
        %v1187 = vadd.f32 %v1087, %v1186
        %v1188 = vpop.f32.mrb[0].mxu0
        %v1189 = vpop.f32.mrb[0].mxu0
        %v1190 = vadd.f32 %v1090, %v1189
        %v1191 = vpop.f32.mrb[0].mxu0
        %1192 = vmatprep.mubr.bf16.mxu0 0
        %1193 = vmatmul.mubr.bf16.gmra.mrb[0].mxu0 %v1131
        %v1194 = vpop.f32.mrb[0].mxu0
        %v1195 = vadd.f32 %v1095, %v1194
        %v1196 = vpop.f32.mrb[0].mxu0
        %v1197 = vpop.f32.mrb[0].mxu0
        %v1198 = vadd.f32 %v1098, %v1197
        %v1199 = vpop.f32.mrb[0].mxu0
        %1200 = vdwg.mxu0
        %v1201 = vld [vmem:[#allocation3] sm:$0xe]
        %v1202 = vld [vmem:[#allocation3 + $0xc] sm:$0xe]
        %v1203 = vld [vmem:[#allocation3 + $0x18] sm:$0xe]
        %v1204 = vld [vmem:[#allocation3 + $0x24] sm:$0xe]
        %vm1213 = vcmask 1042432
        %vm1214 = vcmask 1046532
        %vm1215 = vmor %vm1213, %vm1214
        %v1216 = vrot.slane %v1201, 5
        %v1217 = vrot.slane %v1216, 4
        %v1218 = vrot.slane %v894, 5
        %v1219 = vsel %vm1215, %v1217, %v1218
        %v1220 = vrot.slane %v1218, 4
        %v1221 = vrot.slane %v902, 5
        %v1222 = vsel %vm1215, %v1220, %v1221
        %v1223 = vrot.slane %v1202, 5
        %v1224 = vrot.slane %v1223, 4
        %v1225 = vrot.slane %v896, 5
        %v1226 = vsel %vm1215, %v1224, %v1225
        %v1227 = vrot.slane %v1225, 4
        %v1228 = vrot.slane %v903, 5
        %v1229 = vsel %vm1215, %v1227, %v1228
        %v1230 = vrot.slane %v1203, 5
        %v1231 = vrot.slane %v1230, 4
        %v1232 = vrot.slane %v898, 5
        %v1233 = vsel %vm1215, %v1231, %v1232
        %v1234 = vrot.slane %v1232, 4
        %v1235 = vrot.slane %v904, 5
        %v1236 = vsel %vm1215, %v1234, %v1235
        %v1237 = vrot.slane %v1204, 5
        %v1238 = vrot.slane %v1237, 4
        %v1239 = vrot.slane %v900, 5
        %v1240 = vsel %vm1215, %v1238, %v1239
        %v1241 = vrot.slane %v1239, 4
        %v1242 = vrot.slane %v905, 5
        %v1243 = vsel %vm1215, %v1241, %v1242
        %s1244 = scalar_lea.vmem %s4, 4
        %v1245 = vld [vmem:[%s1244] sm:$0x3]
        %v1246 = vunpack.c.l.b16 %v1219
        %v1247 = vunpack.c.l.b16 %v1222
        %v1248 = vunpack.c.l.b16 %v1226
        %v1249 = vunpack.c.l.b16 %v1229
        %v1250 = vunpack.c.l.b16 %v1233
        %v1251 = vunpack.c.l.b16 %v1236
        %v1252 = vunpack.c.l.b16 %v1240
        %v1253 = vunpack.c.l.b16 %v1243
        %v1254 = vpack.c.b16 %v1247, %v1246
        %v1255 = vpack.c.b16 %v1249, %v1248
        %v1256 = vpack.c.b16 %v1251, %v1250
        %v1257 = vpack.c.b16 %v1253, %v1252
        %v1259 = vsel %vm1019, %v1254, 0
        %v1262 = vsel %vm1019, %v1255, 0
        %v1265 = vsel %vm1019, %v1256, 0
        %v1268 = vsel %vm1019, %v1257, 0
        %v1271 = vsel %vm1032, %v1245, 0
        %1273 = vmatprep.subr.bf16.mxu0 0
        %1274 = vmatpush1.bf16.msra.mxu0 %v1271
        %1275 = vmatprep.subr.bf16.mxu0 0
        %1276 = vmatpush1.bf16.msra.mxu0 0
        %1277 = vmatprep.subr.bf16.mxu0 0
        %1278 = vmatpush1.bf16.msra.mxu0 0
        %1279 = vmatprep.subr.bf16.mxu0 0
        %1280 = vmatpush1.bf16.msra.mxu0 0
        %1281 = vmatprep.subr.bf16.mxu0 0
        %1282 = vmatpush1.bf16.msra.mxu0 0
        %1283 = vmatprep.subr.bf16.mxu0 0
        %1284 = vmatpush1.bf16.msra.mxu0 0
        %1285 = vmatprep.subr.bf16.mxu0 0
        %1286 = vmatpush1.bf16.msra.mxu0 0
        %1287 = vmatprep.subr.bf16.mxu0 0
        %1288 = vmatpush1.bf16.msra.mxu0 0
        %1289 = vmatprep.subr.bf16.mxu0 0
        %1290 = vmatpush1.bf16.msra.mxu0 0
        %1291 = vmatprep.subr.bf16.mxu0 0
        %1292 = vmatpush1.bf16.msra.mxu0 0
        %1293 = vmatprep.subr.bf16.mxu0 0
        %1294 = vmatpush1.bf16.msra.mxu0 0
        %1295 = vmatprep.subr.bf16.mxu0 0
        %1296 = vmatpush1.bf16.msra.mxu0 0
        %1297 = vmatprep.subr.bf16.mxu0 0
        %1298 = vmatpush1.bf16.msra.mxu0 0
        %1299 = vmatprep.subr.bf16.mxu0 0
        %1300 = vmatpush1.bf16.msra.mxu0 0
        %1301 = vmatprep.subr.bf16.mxu0 0
        %1302 = vmatpush1.bf16.msra.mxu0 0
        %1303 = vmatprep.subr.bf16.mxu0 0
        %1304 = vmatpush1.bf16.msra.mxu0 0
        %1305 = vmatprep.mubr.bf16.mxu0 0
        %1306 = vmatmul.mubr.bf16.gmra.mrb[0].mxu0 %v1259
        %v1307 = vpop.f32.mrb[0].mxu0
        %v1308 = vadd.f32 0.0, %v1307
        %v1309 = vpop.f32.mrb[0].mxu0
        %v1310 = vpop.f32.mrb[0].mxu0
        %v1311 = vadd.f32 0.0, %v1310
        %v1312 = vpop.f32.mrb[0].mxu0
        %1313 = vmatprep.mubr.bf16.mxu0 0
        %1314 = vmatmul.mubr.bf16.gmra.mrb[0].mxu0 %v1262
        %v1315 = vpop.f32.mrb[0].mxu0
        %v1316 = vadd.f32 0.0, %v1315
        %v1317 = vpop.f32.mrb[0].mxu0
        %v1318 = vpop.f32.mrb[0].mxu0
        %v1319 = vadd.f32 0.0, %v1318
        %v1320 = vpop.f32.mrb[0].mxu0
        %1321 = vmatprep.mubr.bf16.mxu0 0
        %1322 = vmatmul.mubr.bf16.gmra.mrb[0].mxu0 %v1265
        %v1323 = vpop.f32.mrb[0].mxu0
        %v1324 = vadd.f32 0.0, %v1323
        %v1325 = vpop.f32.mrb[0].mxu0
        %v1326 = vpop.f32.mrb[0].mxu0
        %v1327 = vadd.f32 0.0, %v1326
        %v1328 = vpop.f32.mrb[0].mxu0
        %1329 = vmatprep.mubr.bf16.mxu0 0
        %1330 = vmatmul.mubr.bf16.gmra.mrb[0].mxu0 %v1268
        %v1331 = vpop.f32.mrb[0].mxu0
        %v1332 = vadd.f32 0.0, %v1331
        %v1333 = vpop.f32.mrb[0].mxu0
        %v1334 = vpop.f32.mrb[0].mxu0
        %v1335 = vadd.f32 0.0, %v1334
        %v1336 = vpop.f32.mrb[0].mxu0
        %1337 = vdwg.mxu0
        %v1338 = vadd.f32 %v1171, %v1308
        %v1339 = vadd.f32 %v1174, %v1311
        %v1340 = vadd.f32 %v1179, %v1316
        %v1341 = vadd.f32 %v1182, %v1319
        %v1342 = vadd.f32 %v1187, %v1324
        %v1343 = vadd.f32 %v1190, %v1327
        %v1344 = vadd.f32 %v1195, %v1332
        %v1345 = vadd.f32 %v1198, %v1335
        %v1346 = vld [vmem:[%s652] sm:$0xf]
        %v1347 = vld [vmem:[%s652 + $0x4] sm:$0xf]
        %v1348 = vld [vmem:[%s652 + $0xc] sm:$0xf]
        %v1349 = vld [vmem:[%s652 + $0x10] sm:$0xf]
        %v1350 = vld [vmem:[%s652 + $0x18] sm:$0xf]
        %v1351 = vld [vmem:[%s652 + $0x1c] sm:$0xf]
        %v1352 = vld [vmem:[%s652 + $0x24] sm:$0xf]
        %v1353 = vld [vmem:[%s652 + $0x28] sm:$0xf]
        %s1354 = scalar_lea.vmem %s4, 6
        %v1355 = vld [vmem:[%s1354] sm:$0x3]
        %v1364 = vunpack.c.l.b16 %v1346
        %v1365 = vunpack.c.l.b16 %v1347
        %v1366 = vunpack.c.l.b16 %v1348
        %v1367 = vunpack.c.l.b16 %v1349
        %v1368 = vunpack.c.l.b16 %v1350
        %v1369 = vunpack.c.l.b16 %v1351
        %v1370 = vunpack.c.l.b16 %v1352
        %v1371 = vunpack.c.l.b16 %v1353
        %v1372 = vpack.c.b16 %v1365, %v1364
        %v1373 = vpack.c.b16 %v1367, %v1366
        %v1374 = vpack.c.b16 %v1369, %v1368
        %v1375 = vpack.c.b16 %v1371, %v1370
        %v1377 = vsel %vm1019, %v1372, 0
        %v1380 = vsel %vm1019, %v1373, 0
        %v1383 = vsel %vm1019, %v1374, 0
        %v1386 = vsel %vm1019, %v1375, 0
        %v1389 = vsel %vm1032, %v1355, 0
        %1391 = vmatprep.subr.bf16.mxu0 0
        %1392 = vmatpush1.bf16.msra.mxu0 %v1389
        %1393 = vmatprep.subr.bf16.mxu0 0
        %1394 = vmatpush1.bf16.msra.mxu0 0
        %1395 = vmatprep.subr.bf16.mxu0 0
        %1396 = vmatpush1.bf16.msra.mxu0 0
        %1397 = vmatprep.subr.bf16.mxu0 0
        %1398 = vmatpush1.bf16.msra.mxu0 0
        %1399 = vmatprep.subr.bf16.mxu0 0
        %1400 = vmatpush1.bf16.msra.mxu0 0
        %1401 = vmatprep.subr.bf16.mxu0 0
        %1402 = vmatpush1.bf16.msra.mxu0 0
        %1403 = vmatprep.subr.bf16.mxu0 0
        %1404 = vmatpush1.bf16.msra.mxu0 0
        %1405 = vmatprep.subr.bf16.mxu0 0
        %1406 = vmatpush1.bf16.msra.mxu0 0
        %1407 = vmatprep.subr.bf16.mxu0 0
        %1408 = vmatpush1.bf16.msra.mxu0 0
        %1409 = vmatprep.subr.bf16.mxu0 0
        %1410 = vmatpush1.bf16.msra.mxu0 0
        %1411 = vmatprep.subr.bf16.mxu0 0
        %1412 = vmatpush1.bf16.msra.mxu0 0
        %1413 = vmatprep.subr.bf16.mxu0 0
        %1414 = vmatpush1.bf16.msra.mxu0 0
        %1415 = vmatprep.subr.bf16.mxu0 0
        %1416 = vmatpush1.bf16.msra.mxu0 0
        %1417 = vmatprep.subr.bf16.mxu0 0
        %1418 = vmatpush1.bf16.msra.mxu0 0
        %1419 = vmatprep.subr.bf16.mxu0 0
        %1420 = vmatpush1.bf16.msra.mxu0 0
        %1421 = vmatprep.subr.bf16.mxu0 0
        %1422 = vmatpush1.bf16.msra.mxu0 0
        %1423 = vmatprep.mubr.bf16.mxu0 0
        %1424 = vmatmul.mubr.bf16.gmra.mrb[0].mxu0 %v1377
        %v1425 = vpop.f32.mrb[0].mxu0
        %v1426 = vadd.f32 0.0, %v1425
        %v1427 = vpop.f32.mrb[0].mxu0
        %v1428 = vpop.f32.mrb[0].mxu0
        %v1429 = vadd.f32 0.0, %v1428
        %v1430 = vpop.f32.mrb[0].mxu0
        %1431 = vmatprep.mubr.bf16.mxu0 0
        %1432 = vmatmul.mubr.bf16.gmra.mrb[0].mxu0 %v1380
        %v1433 = vpop.f32.mrb[0].mxu0
        %v1434 = vadd.f32 0.0, %v1433
        %v1435 = vpop.f32.mrb[0].mxu0
        %v1436 = vpop.f32.mrb[0].mxu0
        %v1437 = vadd.f32 0.0, %v1436
        %v1438 = vpop.f32.mrb[0].mxu0
        %1439 = vmatprep.mubr.bf16.mxu0 0
        %1440 = vmatmul.mubr.bf16.gmra.mrb[0].mxu0 %v1383
        %v1441 = vpop.f32.mrb[0].mxu0
        %v1442 = vadd.f32 0.0, %v1441
        %v1443 = vpop.f32.mrb[0].mxu0
        %v1444 = vpop.f32.mrb[0].mxu0
        %v1445 = vadd.f32 0.0, %v1444
        %v1446 = vpop.f32.mrb[0].mxu0
        %1447 = vmatprep.mubr.bf16.mxu0 0
        %1448 = vmatmul.mubr.bf16.gmra.mrb[0].mxu0 %v1386
        %v1449 = vpop.f32.mrb[0].mxu0
        %v1450 = vadd.f32 0.0, %v1449
        %v1451 = vpop.f32.mrb[0].mxu0
        %v1452 = vpop.f32.mrb[0].mxu0
        %v1453 = vadd.f32 0.0, %v1452
        %v1454 = vpop.f32.mrb[0].mxu0
        %1455 = vdwg.mxu0
        %v1456 = vadd.f32 %v1338, %v1426
        %v1457 = vadd.f32 %v1339, %v1429
        %v1458 = vadd.f32 %v1340, %v1434
        %v1459 = vadd.f32 %v1341, %v1437
        %v1460 = vadd.f32 %v1342, %v1442
        %v1461 = vadd.f32 %v1343, %v1445
        %v1462 = vadd.f32 %v1344, %v1450
        %v1463 = vadd.f32 %v1345, %v1453
        %v1464 = vld [vmem:[%s652] sm:$0xf]
        %v1465 = vld [vmem:[%s652 + $0x4] sm:$0xf]
        %v1466 = vld [vmem:[%s652 + $0x8] sm:$0x1]
        %v1467 = vld [vmem:[%s652 + $0xc] sm:$0xf]
        %v1468 = vld [vmem:[%s652 + $0x10] sm:$0xf]
        %v1469 = vld [vmem:[%s652 + $0x14] sm:$0x1]
        %v1470 = vld [vmem:[%s652 + $0x18] sm:$0xf]
        %v1471 = vld [vmem:[%s652 + $0x1c] sm:$0xf]
        %v1472 = vld [vmem:[%s652 + $0x20] sm:$0x1]
        %v1473 = vld [vmem:[%s652 + $0x24] sm:$0xf]
        %v1474 = vld [vmem:[%s652 + $0x28] sm:$0xf]
        %v1475 = vld [vmem:[%s652 + $0x2c] sm:$0x1]
        %v1477 = vshrl.u32 %v1464, 16
        %v1479 = vrot.slane %v1477, 4
        %v1480 = vshll.u32 %v1464, 16
        %v1482 = vrot.slane %v1480, 5
        %v1483 = vor.u32 %v1479, %v1482
        %v1484 = vrot.slane %v1483, 4
        %v1486 = vshll.u32 %v1465, 16
        %v1488 = vrot.slane %v1486, 5
        %v1489 = vsel %vm908, %v1484, %v1488
        %v1490 = vshrl.u32 %v1465, 16
        %v1492 = vrot.slane %v1490, 4
        %v1493 = vor.u32 %v1492, %v1488
        %v1494 = vrot.slane %v1493, 4
        %v1496 = vshll.u32 %v1466, 16
        %v1498 = vrot.slane %v1496, 5
        %v1499 = vsel %vm908, %v1494, %v1498
        %v1501 = vshrl.u32 %v1467, 16
        %v1503 = vrot.slane %v1501, 4
        %v1504 = vshll.u32 %v1467, 16
        %v1506 = vrot.slane %v1504, 5
        %v1507 = vor.u32 %v1503, %v1506
        %v1508 = vrot.slane %v1507, 4
        %v1510 = vshll.u32 %v1468, 16
        %v1512 = vrot.slane %v1510, 5
        %v1513 = vsel %vm908, %v1508, %v1512
        %v1514 = vshrl.u32 %v1468, 16
        %v1516 = vrot.slane %v1514, 4
        %v1517 = vor.u32 %v1516, %v1512
        %v1518 = vrot.slane %v1517, 4
        %v1520 = vshll.u32 %v1469, 16
        %v1522 = vrot.slane %v1520, 5
        %v1523 = vsel %vm908, %v1518, %v1522
        %v1525 = vshrl.u32 %v1470, 16
        %v1527 = vrot.slane %v1525, 4
        %v1528 = vshll.u32 %v1470, 16
        %v1530 = vrot.slane %v1528, 5
        %v1531 = vor.u32 %v1527, %v1530
        %v1532 = vrot.slane %v1531, 4
        %v1534 = vshll.u32 %v1471, 16
        %v1536 = vrot.slane %v1534, 5
        %v1537 = vsel %vm908, %v1532, %v1536
        %v1538 = vshrl.u32 %v1471, 16
        %v1540 = vrot.slane %v1538, 4
        %v1541 = vor.u32 %v1540, %v1536
        %v1542 = vrot.slane %v1541, 4
        %v1544 = vshll.u32 %v1472, 16
        %v1546 = vrot.slane %v1544, 5
        %v1547 = vsel %vm908, %v1542, %v1546
        %v1549 = vshrl.u32 %v1473, 16
        %v1551 = vrot.slane %v1549, 4
        %v1552 = vshll.u32 %v1473, 16
        %v1554 = vrot.slane %v1552, 5
        %v1555 = vor.u32 %v1551, %v1554
        %v1556 = vrot.slane %v1555, 4
        %v1558 = vshll.u32 %v1474, 16
        %v1560 = vrot.slane %v1558, 5
        %v1561 = vsel %vm908, %v1556, %v1560
        %v1562 = vshrl.u32 %v1474, 16
        %v1564 = vrot.slane %v1562, 4
        %v1565 = vor.u32 %v1564, %v1560
        %v1566 = vrot.slane %v1565, 4
        %v1568 = vshll.u32 %v1475, 16
        %v1570 = vrot.slane %v1568, 5
        %v1571 = vsel %vm908, %v1566, %v1570
        %s1572 = scalar_lea.vmem %s4, 8
        %v1573 = vld [vmem:[%s1572] sm:$0x3]
        %v1574 = vunpack.c.l.b16 %v1489
        %v1575 = vunpack.c.l.b16 %v1499
        %v1576 = vunpack.c.l.b16 %v1513
        %v1577 = vunpack.c.l.b16 %v1523
        %v1578 = vunpack.c.l.b16 %v1537
        %v1579 = vunpack.c.l.b16 %v1547
        %v1580 = vunpack.c.l.b16 %v1561
        %v1581 = vunpack.c.l.b16 %v1571
        %v1582 = vpack.c.b16 %v1575, %v1574
        %v1583 = vpack.c.b16 %v1577, %v1576
        %v1584 = vpack.c.b16 %v1579, %v1578
        %v1585 = vpack.c.b16 %v1581, %v1580
        %v1587 = vsel %vm1019, %v1582, 0
        %v1590 = vsel %vm1019, %v1583, 0
        %v1593 = vsel %vm1019, %v1584, 0
        %v1596 = vsel %vm1019, %v1585, 0
        %v1599 = vsel %vm1032, %v1573, 0
        %1601 = vmatprep.subr.bf16.mxu0 0
        %1602 = vmatpush1.bf16.msra.mxu0 %v1599
        %1603 = vmatprep.subr.bf16.mxu0 0
        %1604 = vmatpush1.bf16.msra.mxu0 0
        %1605 = vmatprep.subr.bf16.mxu0 0
        %1606 = vmatpush1.bf16.msra.mxu0 0
        %1607 = vmatprep.subr.bf16.mxu0 0
        %1608 = vmatpush1.bf16.msra.mxu0 0
        %1609 = vmatprep.subr.bf16.mxu0 0
        %1610 = vmatpush1.bf16.msra.mxu0 0
        %1611 = vmatprep.subr.bf16.mxu0 0
        %1612 = vmatpush1.bf16.msra.mxu0 0
        %1613 = vmatprep.subr.bf16.mxu0 0
        %1614 = vmatpush1.bf16.msra.mxu0 0
        %1615 = vmatprep.subr.bf16.mxu0 0
        %1616 = vmatpush1.bf16.msra.mxu0 0
        %1617 = vmatprep.subr.bf16.mxu0 0
        %1618 = vmatpush1.bf16.msra.mxu0 0
        %1619 = vmatprep.subr.bf16.mxu0 0
        %1620 = vmatpush1.bf16.msra.mxu0 0
        %1621 = vmatprep.subr.bf16.mxu0 0
        %1622 = vmatpush1.bf16.msra.mxu0 0
        %1623 = vmatprep.subr.bf16.mxu0 0
        %1624 = vmatpush1.bf16.msra.mxu0 0
        %1625 = vmatprep.subr.bf16.mxu0 0
        %1626 = vmatpush1.bf16.msra.mxu0 0
        %1627 = vmatprep.subr.bf16.mxu0 0
        %1628 = vmatpush1.bf16.msra.mxu0 0
        %1629 = vmatprep.subr.bf16.mxu0 0
        %1630 = vmatpush1.bf16.msra.mxu0 0
        %1631 = vmatprep.subr.bf16.mxu0 0
        %1632 = vmatpush1.bf16.msra.mxu0 0
        %1633 = vmatprep.mubr.bf16.mxu0 0
        %1634 = vmatmul.mubr.bf16.gmra.mrb[0].mxu0 %v1587
        %v1635 = vpop.f32.mrb[0].mxu0
        %v1636 = vadd.f32 0.0, %v1635
        %v1637 = vpop.f32.mrb[0].mxu0
        %v1638 = vpop.f32.mrb[0].mxu0
        %v1639 = vadd.f32 0.0, %v1638
        %v1640 = vpop.f32.mrb[0].mxu0
        %1641 = vmatprep.mubr.bf16.mxu0 0
        %1642 = vmatmul.mubr.bf16.gmra.mrb[0].mxu0 %v1590
        %v1643 = vpop.f32.mrb[0].mxu0
        %v1644 = vadd.f32 0.0, %v1643
        %v1645 = vpop.f32.mrb[0].mxu0
        %v1646 = vpop.f32.mrb[0].mxu0
        %v1647 = vadd.f32 0.0, %v1646
        %v1648 = vpop.f32.mrb[0].mxu0
        %1649 = vmatprep.mubr.bf16.mxu0 0
        %1650 = vmatmul.mubr.bf16.gmra.mrb[0].mxu0 %v1593
        %v1651 = vpop.f32.mrb[0].mxu0
        %v1652 = vadd.f32 0.0, %v1651
        %v1653 = vpop.f32.mrb[0].mxu0
        %v1654 = vpop.f32.mrb[0].mxu0
        %v1655 = vadd.f32 0.0, %v1654
        %v1656 = vpop.f32.mrb[0].mxu0
        %1657 = vmatprep.mubr.bf16.mxu0 0
        %1658 = vmatmul.mubr.bf16.gmra.mrb[0].mxu0 %v1596
        %v1659 = vpop.f32.mrb[0].mxu0
        %v1660 = vadd.f32 0.0, %v1659
        %v1661 = vpop.f32.mrb[0].mxu0
        %v1662 = vpop.f32.mrb[0].mxu0
        %v1663 = vadd.f32 0.0, %v1662
        %v1664 = vpop.f32.mrb[0].mxu0
        %1665 = vdwg.mxu0
        %v1666 = vadd.f32 %v1456, %v1636
        %v1667 = vadd.f32 %v1457, %v1639
        %v1668 = vadd.f32 %v1458, %v1644
        %v1669 = vadd.f32 %v1459, %v1647
        %v1670 = vadd.f32 %v1460, %v1652
        %v1671 = vadd.f32 %v1461, %v1655
        %v1672 = vadd.f32 %v1462, %v1660
        %v1673 = vadd.f32 %v1463, %v1663
        %v1674 = vld [vmem:[%s652] sm:$0xe]
        %v1675 = vld [vmem:[%s652 + $0xc] sm:$0xe]
        %v1676 = vld [vmem:[%s652 + $0x18] sm:$0xe]
        %v1677 = vld [vmem:[%s652 + $0x24] sm:$0xe]
        %v1690 = vrot.slane %v1674, 5
        %v1691 = vrot.slane %v1690, 4
        %v1692 = vrot.slane %v1465, 5
        %v1693 = vsel %vm1215, %v1691, %v1692
        %v1694 = vrot.slane %v1692, 4
        %v1695 = vrot.slane %v1466, 5
        %v1696 = vsel %vm1215, %v1694, %v1695
        %v1697 = vrot.slane %v1675, 5
        %v1698 = vrot.slane %v1697, 4
        %v1699 = vrot.slane %v1468, 5
        %v1700 = vsel %vm1215, %v1698, %v1699
        %v1701 = vrot.slane %v1699, 4
        %v1702 = vrot.slane %v1469, 5
        %v1703 = vsel %vm1215, %v1701, %v1702
        %v1704 = vrot.slane %v1676, 5
        %v1705 = vrot.slane %v1704, 4
        %v1706 = vrot.slane %v1471, 5
        %v1707 = vsel %vm1215, %v1705, %v1706
        %v1708 = vrot.slane %v1706, 4
        %v1709 = vrot.slane %v1472, 5
        %v1710 = vsel %vm1215, %v1708, %v1709
        %v1711 = vrot.slane %v1677, 5
        %v1712 = vrot.slane %v1711, 4
        %v1713 = vrot.slane %v1474, 5
        %v1714 = vsel %vm1215, %v1712, %v1713
        %v1715 = vrot.slane %v1713, 4
        %v1716 = vrot.slane %v1475, 5
        %v1717 = vsel %vm1215, %v1715, %v1716
        %s1718 = scalar_lea.vmem %s4, 10
        %v1719 = vld [vmem:[%s1718] sm:$0x3]
        %v1720 = vunpack.c.l.b16 %v1693
        %v1721 = vunpack.c.l.b16 %v1696
        %v1722 = vunpack.c.l.b16 %v1700
        %v1723 = vunpack.c.l.b16 %v1703
        %v1724 = vunpack.c.l.b16 %v1707
        %v1725 = vunpack.c.l.b16 %v1710
        %v1726 = vunpack.c.l.b16 %v1714
        %v1727 = vunpack.c.l.b16 %v1717
        %v1728 = vpack.c.b16 %v1721, %v1720
        %v1729 = vpack.c.b16 %v1723, %v1722
        %v1730 = vpack.c.b16 %v1725, %v1724
        %v1731 = vpack.c.b16 %v1727, %v1726
        %v1733 = vsel %vm1019, %v1728, 0
        %v1736 = vsel %vm1019, %v1729, 0
        %v1739 = vsel %vm1019, %v1730, 0
        %v1742 = vsel %vm1019, %v1731, 0
        %v1745 = vsel %vm1032, %v1719, 0
        %1747 = vmatprep.subr.bf16.mxu0 0
        %1748 = vmatpush1.bf16.msra.mxu0 %v1745
        %1749 = vmatprep.subr.bf16.mxu0 0
        %1750 = vmatpush1.bf16.msra.mxu0 0
        %1751 = vmatprep.subr.bf16.mxu0 0
        %1752 = vmatpush1.bf16.msra.mxu0 0
        %1753 = vmatprep.subr.bf16.mxu0 0
        %1754 = vmatpush1.bf16.msra.mxu0 0
        %1755 = vmatprep.subr.bf16.mxu0 0
        %1756 = vmatpush1.bf16.msra.mxu0 0
        %1757 = vmatprep.subr.bf16.mxu0 0
        %1758 = vmatpush1.bf16.msra.mxu0 0
        %1759 = vmatprep.subr.bf16.mxu0 0
        %1760 = vmatpush1.bf16.msra.mxu0 0
        %1761 = vmatprep.subr.bf16.mxu0 0
        %1762 = vmatpush1.bf16.msra.mxu0 0
        %1763 = vmatprep.subr.bf16.mxu0 0
        %1764 = vmatpush1.bf16.msra.mxu0 0
        %1765 = vmatprep.subr.bf16.mxu0 0
        %1766 = vmatpush1.bf16.msra.mxu0 0
        %1767 = vmatprep.subr.bf16.mxu0 0
        %1768 = vmatpush1.bf16.msra.mxu0 0
        %1769 = vmatprep.subr.bf16.mxu0 0
        %1770 = vmatpush1.bf16.msra.mxu0 0
        %1771 = vmatprep.subr.bf16.mxu0 0
        %1772 = vmatpush1.bf16.msra.mxu0 0
        %1773 = vmatprep.subr.bf16.mxu0 0
        %1774 = vmatpush1.bf16.msra.mxu0 0
        %1775 = vmatprep.subr.bf16.mxu0 0
        %1776 = vmatpush1.bf16.msra.mxu0 0
        %1777 = vmatprep.subr.bf16.mxu0 0
        %1778 = vmatpush1.bf16.msra.mxu0 0
        %1779 = vmatprep.mubr.bf16.mxu0 0
        %1780 = vmatmul.mubr.bf16.gmra.mrb[0].mxu0 %v1733
        %v1781 = vpop.f32.mrb[0].mxu0
        %v1782 = vadd.f32 0.0, %v1781
        %v1783 = vpop.f32.mrb[0].mxu0
        %v1784 = vpop.f32.mrb[0].mxu0
        %v1785 = vadd.f32 0.0, %v1784
        %v1786 = vpop.f32.mrb[0].mxu0
        %1787 = vmatprep.mubr.bf16.mxu0 0
        %1788 = vmatmul.mubr.bf16.gmra.mrb[0].mxu0 %v1736
        %v1789 = vpop.f32.mrb[0].mxu0
        %v1790 = vadd.f32 0.0, %v1789
        %v1791 = vpop.f32.mrb[0].mxu0
        %v1792 = vpop.f32.mrb[0].mxu0
        %v1793 = vadd.f32 0.0, %v1792
        %v1794 = vpop.f32.mrb[0].mxu0
        %1795 = vmatprep.mubr.bf16.mxu0 0
        %1796 = vmatmul.mubr.bf16.gmra.mrb[0].mxu0 %v1739
        %v1797 = vpop.f32.mrb[0].mxu0
        %v1798 = vadd.f32 0.0, %v1797
        %v1799 = vpop.f32.mrb[0].mxu0
        %v1800 = vpop.f32.mrb[0].mxu0
        %v1801 = vadd.f32 0.0, %v1800
        %v1802 = vpop.f32.mrb[0].mxu0
        %1803 = vmatprep.mubr.bf16.mxu0 0
        %1804 = vmatmul.mubr.bf16.gmra.mrb[0].mxu0 %v1742
        %v1805 = vpop.f32.mrb[0].mxu0
        %v1806 = vadd.f32 0.0, %v1805
        %v1807 = vpop.f32.mrb[0].mxu0
        %v1808 = vpop.f32.mrb[0].mxu0
        %v1809 = vadd.f32 0.0, %v1808
        %v1810 = vpop.f32.mrb[0].mxu0
        %1811 = vdwg.mxu0
        %v1812 = vadd.f32 %v1666, %v1782
        %v1813 = vadd.f32 %v1667, %v1785
        %v1814 = vadd.f32 %v1668, %v1790
        %v1815 = vadd.f32 %v1669, %v1793
        %v1816 = vadd.f32 %v1670, %v1798
        %v1817 = vadd.f32 %v1671, %v1801
        %v1818 = vadd.f32 %v1672, %v1806
        %v1819 = vadd.f32 %v1673, %v1809
        %s1820 = scalar_lea.vmem [#allocation3], 24
        %v1821 = vld [vmem:[%s1820] sm:$0xf]
        %v1822 = vld [vmem:[%s1820 + $0x4] sm:$0xf]
        %v1823 = vld [vmem:[%s1820 + $0xc] sm:$0xf]
        %v1824 = vld [vmem:[%s1820 + $0x10] sm:$0xf]
        %v1825 = vld [vmem:[%s1820 + $0x18] sm:$0xf]
        %v1826 = vld [vmem:[%s1820 + $0x1c] sm:$0xf]
        %v1827 = vld [vmem:[%s1820 + $0x24] sm:$0xf]
        %v1828 = vld [vmem:[%s1820 + $0x28] sm:$0xf]
        %s1829 = scalar_lea.vmem %s4, 12
        %v1830 = vld [vmem:[%s1829] sm:$0x3]
        %v1839 = vunpack.c.l.b16 %v1821
        %v1840 = vunpack.c.l.b16 %v1822
        %v1841 = vunpack.c.l.b16 %v1823
        %v1842 = vunpack.c.l.b16 %v1824
        %v1843 = vunpack.c.l.b16 %v1825
        %v1844 = vunpack.c.l.b16 %v1826
        %v1845 = vunpack.c.l.b16 %v1827
        %v1846 = vunpack.c.l.b16 %v1828
        %v1847 = vpack.c.b16 %v1840, %v1839
        %v1848 = vpack.c.b16 %v1842, %v1841
        %v1849 = vpack.c.b16 %v1844, %v1843
        %v1850 = vpack.c.b16 %v1846, %v1845
        %v1852 = vsel %vm1019, %v1847, 0
        %v1855 = vsel %vm1019, %v1848, 0
        %v1858 = vsel %vm1019, %v1849, 0
        %v1861 = vsel %vm1019, %v1850, 0
        %v1864 = vsel %vm1032, %v1830, 0
        %1866 = vmatprep.subr.bf16.mxu0 0
        %1867 = vmatpush1.bf16.msra.mxu0 %v1864
        %1868 = vmatprep.subr.bf16.mxu0 0
        %1869 = vmatpush1.bf16.msra.mxu0 0
        %1870 = vmatprep.subr.bf16.mxu0 0
        %1871 = vmatpush1.bf16.msra.mxu0 0
        %1872 = vmatprep.subr.bf16.mxu0 0
        %1873 = vmatpush1.bf16.msra.mxu0 0
        %1874 = vmatprep.subr.bf16.mxu0 0
        %1875 = vmatpush1.bf16.msra.mxu0 0
        %1876 = vmatprep.subr.bf16.mxu0 0
        %1877 = vmatpush1.bf16.msra.mxu0 0
        %1878 = vmatprep.subr.bf16.mxu0 0
        %1879 = vmatpush1.bf16.msra.mxu0 0
        %1880 = vmatprep.subr.bf16.mxu0 0
        %1881 = vmatpush1.bf16.msra.mxu0 0
        %1882 = vmatprep.subr.bf16.mxu0 0
        %1883 = vmatpush1.bf16.msra.mxu0 0
        %1884 = vmatprep.subr.bf16.mxu0 0
        %1885 = vmatpush1.bf16.msra.mxu0 0
        %1886 = vmatprep.subr.bf16.mxu0 0
        %1887 = vmatpush1.bf16.msra.mxu0 0
        %1888 = vmatprep.subr.bf16.mxu0 0
        %1889 = vmatpush1.bf16.msra.mxu0 0
        %1890 = vmatprep.subr.bf16.mxu0 0
        %1891 = vmatpush1.bf16.msra.mxu0 0
        %1892 = vmatprep.subr.bf16.mxu0 0
        %1893 = vmatpush1.bf16.msra.mxu0 0
        %1894 = vmatprep.subr.bf16.mxu0 0
        %1895 = vmatpush1.bf16.msra.mxu0 0
        %1896 = vmatprep.subr.bf16.mxu0 0
        %1897 = vmatpush1.bf16.msra.mxu0 0
        %1898 = vmatprep.mubr.bf16.mxu0 0
        %1899 = vmatmul.mubr.bf16.gmra.mrb[0].mxu0 %v1852
        %v1900 = vpop.f32.mrb[0].mxu0
        %v1901 = vadd.f32 0.0, %v1900
        %v1902 = vpop.f32.mrb[0].mxu0
        %v1903 = vpop.f32.mrb[0].mxu0
        %v1904 = vadd.f32 0.0, %v1903
        %v1905 = vpop.f32.mrb[0].mxu0
        %1906 = vmatprep.mubr.bf16.mxu0 0
        %1907 = vmatmul.mubr.bf16.gmra.mrb[0].mxu0 %v1855
        %v1908 = vpop.f32.mrb[0].mxu0
        %v1909 = vadd.f32 0.0, %v1908
        %v1910 = vpop.f32.mrb[0].mxu0
        %v1911 = vpop.f32.mrb[0].mxu0
        %v1912 = vadd.f32 0.0, %v1911
        %v1913 = vpop.f32.mrb[0].mxu0
        %1914 = vmatprep.mubr.bf16.mxu0 0
        %1915 = vmatmul.mubr.bf16.gmra.mrb[0].mxu0 %v1858
        %v1916 = vpop.f32.mrb[0].mxu0
        %v1917 = vadd.f32 0.0, %v1916
        %v1918 = vpop.f32.mrb[0].mxu0
        %v1919 = vpop.f32.mrb[0].mxu0
        %v1920 = vadd.f32 0.0, %v1919
        %v1921 = vpop.f32.mrb[0].mxu0
        %1922 = vmatprep.mubr.bf16.mxu0 0
        %1923 = vmatmul.mubr.bf16.gmra.mrb[0].mxu0 %v1861
        %v1924 = vpop.f32.mrb[0].mxu0
        %v1925 = vadd.f32 0.0, %v1924
        %v1926 = vpop.f32.mrb[0].mxu0
        %v1927 = vpop.f32.mrb[0].mxu0
        %v1928 = vadd.f32 0.0, %v1927
        %v1929 = vpop.f32.mrb[0].mxu0
        %1930 = vdwg.mxu0
        %v1931 = vadd.f32 %v1812, %v1901
        %v1932 = vadd.f32 %v1813, %v1904
        %v1933 = vadd.f32 %v1814, %v1909
        %v1934 = vadd.f32 %v1815, %v1912
        %v1935 = vadd.f32 %v1816, %v1917
        %v1936 = vadd.f32 %v1817, %v1920
        %v1937 = vadd.f32 %v1818, %v1925
        %v1938 = vadd.f32 %v1819, %v1928
        %v1939 = vld [vmem:[%s1820] sm:$0xf]
        %v1940 = vld [vmem:[%s1820 + $0x4] sm:$0xf]
        %v1941 = vld [vmem:[%s1820 + $0x8] sm:$0x1]
        %v1942 = vld [vmem:[%s1820 + $0xc] sm:$0xf]
        %v1943 = vld [vmem:[%s1820 + $0x10] sm:$0xf]
        %v1944 = vld [vmem:[%s1820 + $0x14] sm:$0x1]
        %v1945 = vld [vmem:[%s1820 + $0x18] sm:$0xf]
        %v1946 = vld [vmem:[%s1820 + $0x1c] sm:$0xf]
        %v1947 = vld [vmem:[%s1820 + $0x20] sm:$0x1]
        %v1948 = vld [vmem:[%s1820 + $0x24] sm:$0xf]
        %v1949 = vld [vmem:[%s1820 + $0x28] sm:$0xf]
        %v1950 = vld [vmem:[%s1820 + $0x2c] sm:$0x1]
        %v1952 = vshrl.u32 %v1939, 16
        %v1954 = vrot.slane %v1952, 4
        %v1955 = vshll.u32 %v1939, 16
        %v1957 = vrot.slane %v1955, 5
        %v1958 = vor.u32 %v1954, %v1957
        %v1959 = vrot.slane %v1958, 4
        %v1961 = vshll.u32 %v1940, 16
        %v1963 = vrot.slane %v1961, 5
        %v1964 = vsel %vm908, %v1959, %v1963
        %v1965 = vshrl.u32 %v1940, 16
        %v1967 = vrot.slane %v1965, 4
        %v1968 = vor.u32 %v1967, %v1963
        %v1969 = vrot.slane %v1968, 4
        %v1971 = vshll.u32 %v1941, 16
        %v1973 = vrot.slane %v1971, 5
        %v1974 = vsel %vm908, %v1969, %v1973
        %v1976 = vshrl.u32 %v1942, 16
        %v1978 = vrot.slane %v1976, 4
        %v1979 = vshll.u32 %v1942, 16
        %v1981 = vrot.slane %v1979, 5
        %v1982 = vor.u32 %v1978, %v1981
        %v1983 = vrot.slane %v1982, 4
        %v1985 = vshll.u32 %v1943, 16
        %v1987 = vrot.slane %v1985, 5
        %v1988 = vsel %vm908, %v1983, %v1987
        %v1989 = vshrl.u32 %v1943, 16
        %v1991 = vrot.slane %v1989, 4
        %v1992 = vor.u32 %v1991, %v1987
        %v1993 = vrot.slane %v1992, 4
        %v1995 = vshll.u32 %v1944, 16
        %v1997 = vrot.slane %v1995, 5
        %v1998 = vsel %vm908, %v1993, %v1997
        %v2000 = vshrl.u32 %v1945, 16
        %v2002 = vrot.slane %v2000, 4
        %v2003 = vshll.u32 %v1945, 16
        %v2005 = vrot.slane %v2003, 5
        %v2006 = vor.u32 %v2002, %v2005
        %v2007 = vrot.slane %v2006, 4
        %v2009 = vshll.u32 %v1946, 16
        %v2011 = vrot.slane %v2009, 5
        %v2012 = vsel %vm908, %v2007, %v2011
        %v2013 = vshrl.u32 %v1946, 16
        %v2015 = vrot.slane %v2013, 4
        %v2016 = vor.u32 %v2015, %v2011
        %v2017 = vrot.slane %v2016, 4
        %v2019 = vshll.u32 %v1947, 16
        %v2021 = vrot.slane %v2019, 5
        %v2022 = vsel %vm908, %v2017, %v2021
        %v2024 = vshrl.u32 %v1948, 16
        %v2026 = vrot.slane %v2024, 4
        %v2027 = vshll.u32 %v1948, 16
        %v2029 = vrot.slane %v2027, 5
        %v2030 = vor.u32 %v2026, %v2029
        %v2031 = vrot.slane %v2030, 4
        %v2033 = vshll.u32 %v1949, 16
        %v2035 = vrot.slane %v2033, 5
        %v2036 = vsel %vm908, %v2031, %v2035
        %v2037 = vshrl.u32 %v1949, 16
        %v2039 = vrot.slane %v2037, 4
        %v2040 = vor.u32 %v2039, %v2035
        %v2041 = vrot.slane %v2040, 4
        %v2043 = vshll.u32 %v1950, 16
        %v2045 = vrot.slane %v2043, 5
        %v2046 = vsel %vm908, %v2041, %v2045
        %s2047 = scalar_lea.vmem %s4, 14
        %v2048 = vld [vmem:[%s2047] sm:$0x3]
        %v2049 = vunpack.c.l.b16 %v1964
        %v2050 = vunpack.c.l.b16 %v1974
        %v2051 = vunpack.c.l.b16 %v1988
        %v2052 = vunpack.c.l.b16 %v1998
        %v2053 = vunpack.c.l.b16 %v2012
        %v2054 = vunpack.c.l.b16 %v2022
        %v2055 = vunpack.c.l.b16 %v2036
        %v2056 = vunpack.c.l.b16 %v2046
        %v2057 = vpack.c.b16 %v2050, %v2049
        %v2058 = vpack.c.b16 %v2052, %v2051
        %v2059 = vpack.c.b16 %v2054, %v2053
        %v2060 = vpack.c.b16 %v2056, %v2055
        %v2062 = vsel %vm1019, %v2057, 0
        %v2065 = vsel %vm1019, %v2058, 0
        %v2068 = vsel %vm1019, %v2059, 0
        %v2071 = vsel %vm1019, %v2060, 0
        %v2074 = vsel %vm1032, %v2048, 0
        %2076 = vmatprep.subr.bf16.mxu0 0
        %2077 = vmatpush1.bf16.msra.mxu0 %v2074
        %2078 = vmatprep.subr.bf16.mxu0 0
        %2079 = vmatpush1.bf16.msra.mxu0 0
        %2080 = vmatprep.subr.bf16.mxu0 0
        %2081 = vmatpush1.bf16.msra.mxu0 0
        %2082 = vmatprep.subr.bf16.mxu0 0
        %2083 = vmatpush1.bf16.msra.mxu0 0
        %2084 = vmatprep.subr.bf16.mxu0 0
        %2085 = vmatpush1.bf16.msra.mxu0 0
        %2086 = vmatprep.subr.bf16.mxu0 0
        %2087 = vmatpush1.bf16.msra.mxu0 0
        %2088 = vmatprep.subr.bf16.mxu0 0
        %2089 = vmatpush1.bf16.msra.mxu0 0
        %2090 = vmatprep.subr.bf16.mxu0 0
        %2091 = vmatpush1.bf16.msra.mxu0 0
        %2092 = vmatprep.subr.bf16.mxu0 0
        %2093 = vmatpush1.bf16.msra.mxu0 0
        %2094 = vmatprep.subr.bf16.mxu0 0
        %2095 = vmatpush1.bf16.msra.mxu0 0
        %2096 = vmatprep.subr.bf16.mxu0 0
        %2097 = vmatpush1.bf16.msra.mxu0 0
        %2098 = vmatprep.subr.bf16.mxu0 0
        %2099 = vmatpush1.bf16.msra.mxu0 0
        %2100 = vmatprep.subr.bf16.mxu0 0
        %2101 = vmatpush1.bf16.msra.mxu0 0
        %2102 = vmatprep.subr.bf16.mxu0 0
        %2103 = vmatpush1.bf16.msra.mxu0 0
        %2104 = vmatprep.subr.bf16.mxu0 0
        %2105 = vmatpush1.bf16.msra.mxu0 0
        %2106 = vmatprep.subr.bf16.mxu0 0
        %2107 = vmatpush1.bf16.msra.mxu0 0
        %2108 = vmatprep.mubr.bf16.mxu0 0
        %2109 = vmatmul.mubr.bf16.gmra.mrb[0].mxu0 %v2062
        %v2110 = vpop.f32.mrb[0].mxu0
        %v2111 = vadd.f32 0.0, %v2110
        %v2112 = vpop.f32.mrb[0].mxu0
        %v2113 = vpop.f32.mrb[0].mxu0
        %v2114 = vadd.f32 0.0, %v2113
        %v2115 = vpop.f32.mrb[0].mxu0
        %2116 = vmatprep.mubr.bf16.mxu0 0
        %2117 = vmatmul.mubr.bf16.gmra.mrb[0].mxu0 %v2065
        %v2118 = vpop.f32.mrb[0].mxu0
        %v2119 = vadd.f32 0.0, %v2118
        %v2120 = vpop.f32.mrb[0].mxu0
        %v2121 = vpop.f32.mrb[0].mxu0
        %v2122 = vadd.f32 0.0, %v2121
        %v2123 = vpop.f32.mrb[0].mxu0
        %2124 = vmatprep.mubr.bf16.mxu0 0
        %2125 = vmatmul.mubr.bf16.gmra.mrb[0].mxu0 %v2068
        %v2126 = vpop.f32.mrb[0].mxu0
        %v2127 = vadd.f32 0.0, %v2126
        %v2128 = vpop.f32.mrb[0].mxu0
        %v2129 = vpop.f32.mrb[0].mxu0
        %v2130 = vadd.f32 0.0, %v2129
        %v2131 = vpop.f32.mrb[0].mxu0
        %2132 = vmatprep.mubr.bf16.mxu0 0
        %2133 = vmatmul.mubr.bf16.gmra.mrb[0].mxu0 %v2071
        %v2134 = vpop.f32.mrb[0].mxu0
        %v2135 = vadd.f32 0.0, %v2134
        %v2136 = vpop.f32.mrb[0].mxu0
        %v2137 = vpop.f32.mrb[0].mxu0
        %v2138 = vadd.f32 0.0, %v2137
        %v2139 = vpop.f32.mrb[0].mxu0
        %2140 = vdwg.mxu0
        %v2141 = vadd.f32 %v1931, %v2111
        %v2142 = vadd.f32 %v1932, %v2114
        %v2143 = vadd.f32 %v1933, %v2119
        %v2144 = vadd.f32 %v1934, %v2122
        %v2145 = vadd.f32 %v1935, %v2127
        %v2146 = vadd.f32 %v1936, %v2130
        %v2147 = vadd.f32 %v1937, %v2135
        %v2148 = vadd.f32 %v1938, %v2138
        %v2149 = vld [vmem:[%s1820] sm:$0xe]
        %v2150 = vld [vmem:[%s1820 + $0xc] sm:$0xe]
        %v2151 = vld [vmem:[%s1820 + $0x18] sm:$0xe]
        %v2152 = vld [vmem:[%s1820 + $0x24] sm:$0xe]
        %v2165 = vrot.slane %v2149, 5
        %v2166 = vrot.slane %v2165, 4
        %v2167 = vrot.slane %v1940, 5
        %v2168 = vsel %vm1215, %v2166, %v2167
        %v2169 = vrot.slane %v2167, 4
        %v2170 = vrot.slane %v1941, 5
        %v2171 = vsel %vm1215, %v2169, %v2170
        %v2172 = vrot.slane %v2150, 5
        %v2173 = vrot.slane %v2172, 4
        %v2174 = vrot.slane %v1943, 5
        %v2175 = vsel %vm1215, %v2173, %v2174
        %v2176 = vrot.slane %v2174, 4
        %v2177 = vrot.slane %v1944, 5
        %v2178 = vsel %vm1215, %v2176, %v2177
        %v2179 = vrot.slane %v2151, 5
        %v2180 = vrot.slane %v2179, 4
        %v2181 = vrot.slane %v1946, 5
        %v2182 = vsel %vm1215, %v2180, %v2181
        %v2183 = vrot.slane %v2181, 4
        %v2184 = vrot.slane %v1947, 5
        %v2185 = vsel %vm1215, %v2183, %v2184
        %v2186 = vrot.slane %v2152, 5
        %v2187 = vrot.slane %v2186, 4
        %v2188 = vrot.slane %v1949, 5
        %v2189 = vsel %vm1215, %v2187, %v2188
        %v2190 = vrot.slane %v2188, 4
        %v2191 = vrot.slane %v1950, 5
        %v2192 = vsel %vm1215, %v2190, %v2191
        %s2193 = scalar_lea.vmem %s4, 16
        %v2194 = vld [vmem:[%s2193] sm:$0x3]
        %v2195 = vunpack.c.l.b16 %v2168
        %v2196 = vunpack.c.l.b16 %v2171
        %v2197 = vunpack.c.l.b16 %v2175
        %v2198 = vunpack.c.l.b16 %v2178
        %v2199 = vunpack.c.l.b16 %v2182
        %v2200 = vunpack.c.l.b16 %v2185
        %v2201 = vunpack.c.l.b16 %v2189
        %v2202 = vunpack.c.l.b16 %v2192
        %v2203 = vpack.c.b16 %v2196, %v2195
        %v2204 = vpack.c.b16 %v2198, %v2197
        %v2205 = vpack.c.b16 %v2200, %v2199
        %v2206 = vpack.c.b16 %v2202, %v2201
        %v2208 = vsel %vm1019, %v2203, 0
        %v2211 = vsel %vm1019, %v2204, 0
        %v2214 = vsel %vm1019, %v2205, 0
        %v2217 = vsel %vm1019, %v2206, 0
        %v2220 = vsel %vm1032, %v2194, 0
        %2222 = vmatprep.subr.bf16.mxu0 0
        %2223 = vmatpush1.bf16.msra.mxu0 %v2220
        %2224 = vmatprep.subr.bf16.mxu0 0
        %2225 = vmatpush1.bf16.msra.mxu0 0
        %2226 = vmatprep.subr.bf16.mxu0 0
        %2227 = vmatpush1.bf16.msra.mxu0 0
        %2228 = vmatprep.subr.bf16.mxu0 0
        %2229 = vmatpush1.bf16.msra.mxu0 0
        %2230 = vmatprep.subr.bf16.mxu0 0
        %2231 = vmatpush1.bf16.msra.mxu0 0
        %2232 = vmatprep.subr.bf16.mxu0 0
        %2233 = vmatpush1.bf16.msra.mxu0 0
        %2234 = vmatprep.subr.bf16.mxu0 0
        %2235 = vmatpush1.bf16.msra.mxu0 0
        %2236 = vmatprep.subr.bf16.mxu0 0
        %2237 = vmatpush1.bf16.msra.mxu0 0
        %2238 = vmatprep.subr.bf16.mxu0 0
        %2239 = vmatpush1.bf16.msra.mxu0 0
        %2240 = vmatprep.subr.bf16.mxu0 0
        %2241 = vmatpush1.bf16.msra.mxu0 0
        %2242 = vmatprep.subr.bf16.mxu0 0
        %2243 = vmatpush1.bf16.msra.mxu0 0
        %2244 = vmatprep.subr.bf16.mxu0 0
        %2245 = vmatpush1.bf16.msra.mxu0 0
        %2246 = vmatprep.subr.bf16.mxu0 0
        %2247 = vmatpush1.bf16.msra.mxu0 0
        %2248 = vmatprep.subr.bf16.mxu0 0
        %2249 = vmatpush1.bf16.msra.mxu0 0
        %2250 = vmatprep.subr.bf16.mxu0 0
        %2251 = vmatpush1.bf16.msra.mxu0 0
        %2252 = vmatprep.subr.bf16.mxu0 0
        %2253 = vmatpush1.bf16.msra.mxu0 0
        %2254 = vmatprep.mubr.bf16.mxu0 0
        %2255 = vmatmul.mubr.bf16.gmra.mrb[0].mxu0 %v2208
        %v2256 = vpop.f32.mrb[0].mxu0
        %v2257 = vadd.f32 0.0, %v2256
        %v2258 = vpop.f32.mrb[0].mxu0
        %v2259 = vpop.f32.mrb[0].mxu0
        %v2260 = vadd.f32 0.0, %v2259
        %v2261 = vpop.f32.mrb[0].mxu0
        %2262 = vmatprep.mubr.bf16.mxu0 0
        %2263 = vmatmul.mubr.bf16.gmra.mrb[0].mxu0 %v2211
        %v2264 = vpop.f32.mrb[0].mxu0
        %v2265 = vadd.f32 0.0, %v2264
        %v2266 = vpop.f32.mrb[0].mxu0
        %v2267 = vpop.f32.mrb[0].mxu0
        %v2268 = vadd.f32 0.0, %v2267
        %v2269 = vpop.f32.mrb[0].mxu0
        %2270 = vmatprep.mubr.bf16.mxu0 0
        %2271 = vmatmul.mubr.bf16.gmra.mrb[0].mxu0 %v2214
        %v2272 = vpop.f32.mrb[0].mxu0
        %v2273 = vadd.f32 0.0, %v2272
        %v2274 = vpop.f32.mrb[0].mxu0
        %v2275 = vpop.f32.mrb[0].mxu0
        %v2276 = vadd.f32 0.0, %v2275
        %v2277 = vpop.f32.mrb[0].mxu0
        %2278 = vmatprep.mubr.bf16.mxu0 0
        %2279 = vmatmul.mubr.bf16.gmra.mrb[0].mxu0 %v2217
        %v2280 = vpop.f32.mrb[0].mxu0
        %v2281 = vadd.f32 0.0, %v2280
        %v2282 = vpop.f32.mrb[0].mxu0
        %v2283 = vpop.f32.mrb[0].mxu0
        %v2284 = vadd.f32 0.0, %v2283
        %v2285 = vpop.f32.mrb[0].mxu0
        %2286 = vdwg.mxu0
        %v2287 = vadd.f32 %v2141, %v2257
        %v2288 = vadd.f32 %v2142, %v2260
        %v2289 = vadd.f32 %v2143, %v2265
        %v2290 = vadd.f32 %v2144, %v2268
        %v2291 = vadd.f32 %v2145, %v2273
        %v2292 = vadd.f32 %v2146, %v2276
        %v2293 = vadd.f32 %v2147, %v2281
        %v2294 = vadd.f32 %v2148, %v2284
        %v2295 = vld [vmem:[%s5] sm:$0x1]
        %v2297 = vlaneseq
        %v2298 = vshrl.u32 %v2297, 7
        %v2299 = vsub.s32 0, %v2298
        %v2300 = vrot.slane %v2295, %v2299
        %v2302 = vadd.f32 %v2287, %v2300
        %v2303 = vadd.f32 %v2288, %v2300
        %v2304 = vadd.f32 %v2289, %v2300
        %v2305 = vadd.f32 %v2290, %v2300
        %v2306 = vadd.f32 %v2291, %v2300
        %v2307 = vadd.f32 %v2292, %v2300
        %v2308 = vadd.f32 %v2293, %v2300
        %v2309 = vadd.f32 %v2294, %v2300
        %v2310 = vmax.f32 %v2302, 0.0
        %v2311 = vmax.f32 %v2303, 0.0
        %v2312 = vmax.f32 %v2304, 0.0
        %v2313 = vmax.f32 %v2305, 0.0
        %v2314 = vmax.f32 %v2306, 0.0
        %v2315 = vmax.f32 %v2307, 0.0
        %v2316 = vmax.f32 %v2308, 0.0
        %v2317 = vmax.f32 %v2309, 0.0
        %v2318 = vpack.c.bf16 %v2311, %v2310
        %v2319 = vpack.c.bf16 %v2313, %v2312
        %v2320 = vpack.c.bf16 %v2315, %v2314
        %v2321 = vpack.c.bf16 %v2317, %v2316
        %v2322 = vld [vmem:[%s6] sm:$0x3]
        %v2323 = vld [vmem:[%s7] sm:$0x1]
        %v2325 = vlaneseq
        %v2326 = vshrl.u32 %v2325, 7
        %v2327 = vsub.s32 0, %v2326
        %v2328 = vrot.slane %v2323, %v2327
        %v2331 = vsel %vm1019, %v2318, 0
        %v2334 = vsel %vm1019, %v2319, 0
        %v2337 = vsel %vm1019, %v2320, 0
        %v2340 = vsel %vm1019, %v2321, 0
        %v2343 = vsel %vm1032, %v2322, 0
        %2345 = vmatprep.subr.bf16.mxu0 0
        %2346 = vmatpush1.bf16.msra.mxu0 %v2343
        %2347 = vmatprep.subr.bf16.mxu0 0
        %2348 = vmatpush1.bf16.msra.mxu0 0
        %2349 = vmatprep.subr.bf16.mxu0 0
        %2350 = vmatpush1.bf16.msra.mxu0 0
        %2351 = vmatprep.subr.bf16.mxu0 0
        %2352 = vmatpush1.bf16.msra.mxu0 0
        %2353 = vmatprep.subr.bf16.mxu0 0
        %2354 = vmatpush1.bf16.msra.mxu0 0
        %2355 = vmatprep.subr.bf16.mxu0 0
        %2356 = vmatpush1.bf16.msra.mxu0 0
        %2357 = vmatprep.subr.bf16.mxu0 0
        %2358 = vmatpush1.bf16.msra.mxu0 0
        %2359 = vmatprep.subr.bf16.mxu0 0
        %2360 = vmatpush1.bf16.msra.mxu0 0
        %2361 = vmatprep.subr.bf16.mxu0 0
        %2362 = vmatpush1.bf16.msra.mxu0 0
        %2363 = vmatprep.subr.bf16.mxu0 0
        %2364 = vmatpush1.bf16.msra.mxu0 0
        %2365 = vmatprep.subr.bf16.mxu0 0
        %2366 = vmatpush1.bf16.msra.mxu0 0
        %2367 = vmatprep.subr.bf16.mxu0 0
        %2368 = vmatpush1.bf16.msra.mxu0 0
        %2369 = vmatprep.subr.bf16.mxu0 0
        %2370 = vmatpush1.bf16.msra.mxu0 0
        %2371 = vmatprep.subr.bf16.mxu0 0
        %2372 = vmatpush1.bf16.msra.mxu0 0
        %2373 = vmatprep.subr.bf16.mxu0 0
        %2374 = vmatpush1.bf16.msra.mxu0 0
        %2375 = vmatprep.subr.bf16.mxu0 0
        %2376 = vmatpush1.bf16.msra.mxu0 0
        %2377 = vmatprep.mubr.bf16.mxu0 0
        %2378 = vmatmul.mubr.bf16.gmra.mrb[0].mxu0 %v2331
        %v2379 = vpop.f32.mrb[0].mxu0
        %v2380 = vadd.f32 %v2328, %v2379
        %v2381 = vpop.f32.mrb[0].mxu0
        %v2382 = vpop.f32.mrb[0].mxu0
        %v2383 = vadd.f32 %v2328, %v2382
        %v2384 = vpop.f32.mrb[0].mxu0
        %2385 = vmatprep.mubr.bf16.mxu0 0
        %2386 = vmatmul.mubr.bf16.gmra.mrb[0].mxu0 %v2334
        %v2387 = vpop.f32.mrb[0].mxu0
        %v2388 = vadd.f32 %v2328, %v2387
        %v2389 = vpop.f32.mrb[0].mxu0
        %v2390 = vpop.f32.mrb[0].mxu0
        %v2391 = vadd.f32 %v2328, %v2390
        %v2392 = vpop.f32.mrb[0].mxu0
        %2393 = vmatprep.mubr.bf16.mxu0 0
        %2394 = vmatmul.mubr.bf16.gmra.mrb[0].mxu0 %v2337
        %v2395 = vpop.f32.mrb[0].mxu0
        %v2396 = vadd.f32 %v2328, %v2395
        %v2397 = vpop.f32.mrb[0].mxu0
        %v2398 = vpop.f32.mrb[0].mxu0
        %v2399 = vadd.f32 %v2328, %v2398
        %v2400 = vpop.f32.mrb[0].mxu0
        %2401 = vmatprep.mubr.bf16.mxu0 0
        %2402 = vmatmul.mubr.bf16.gmra.mrb[0].mxu0 %v2340
        %v2403 = vpop.f32.mrb[0].mxu0
        %v2404 = vadd.f32 %v2328, %v2403
        %v2405 = vpop.f32.mrb[0].mxu0
        %v2406 = vpop.f32.mrb[0].mxu0
        %v2407 = vadd.f32 %v2328, %v2406
        %v2408 = vpop.f32.mrb[0].mxu0
        %2409 = vdwg.mxu0
        %v2410 = vunpack.c.l.bf16 %v416
        %v2411 = vunpack.c.l.bf16 %v417
        %v2412 = vunpack.c.l.bf16 %v418
        %v2413 = vunpack.c.l.bf16 %v419
        %v2414 = vunpack.c.l.bf16 %v420
        %v2415 = vunpack.c.l.bf16 %v421
        %v2416 = vunpack.c.l.bf16 %v422
        %v2417 = vunpack.c.l.bf16 %v423
        %v2418 = vadd.f32 %v2380, %v2410
        %v2419 = vadd.f32 %v2383, %v2411
        %v2420 = vadd.f32 %v2388, %v2412
        %v2421 = vadd.f32 %v2391, %v2413
        %v2422 = vadd.f32 %v2396, %v2414
        %v2423 = vadd.f32 %v2399, %v2415
        %v2424 = vadd.f32 %v2404, %v2416
        %v2425 = vadd.f32 %v2407, %v2417
        %v2426 = vmax.f32 %v2418, 0.0
        %v2427 = vmax.f32 %v2419, 0.0
        %v2428 = vmax.f32 %v2420, 0.0
        %v2429 = vmax.f32 %v2421, 0.0
        %v2430 = vmax.f32 %v2422, 0.0
        %v2431 = vmax.f32 %v2423, 0.0
        %v2432 = vmax.f32 %v2424, 0.0
        %v2433 = vmax.f32 %v2425, 0.0
        %v2434 = vpack.c.bf16 %v2427, %v2426
        %v2435 = vpack.c.bf16 %v2429, %v2428
        %v2436 = vpack.c.bf16 %v2431, %v2430
        %v2437 = vpack.c.bf16 %v2433, %v2432
        %v2442 = vunpack.c.l.b16 %v2434
        %v2443 = vunpack.c.h.b16 %v2434
        %v2444 = vunpack.c.l.b16 %v2435
        %v2445 = vunpack.c.h.b16 %v2435
        %v2446 = vunpack.c.l.b16 %v2436
        %v2447 = vunpack.c.h.b16 %v2436
        %v2448 = vunpack.c.l.b16 %v2437
        %v2449 = vunpack.c.h.b16 %v2437
        %v2450 = vpack.c.b16 %v2442, %v2442
        %v2451 = vpack.c.b16 %v2443, %v2443
        %v2452 = vpack.c.b16 %v2444, %v2444
        %v2453 = vpack.c.b16 %v2445, %v2445
        %v2454 = vpack.c.b16 %v2446, %v2446
        %v2455 = vpack.c.b16 %v2447, %v2447
        %v2456 = vpack.c.b16 %v2448, %v2448
        %v2457 = vpack.c.b16 %v2449, %v2449
        %vm2466 = vcmask 125952
        %2467 = vst.msk [vmem:[%s299] sm:$0xf] %vm2466, %v2450
        %2468 = vst.msk [vmem:[%s299 + $0x4] sm:$0xf] %vm2466, %v2451
        %2469 = vst.msk [vmem:[%s299 + $0x8] sm:$0xf] %vm2466, %v2452
        %2470 = vst.msk [vmem:[%s299 + $0xc] sm:$0xf] %vm2466, %v2453
        %2471 = vst.msk [vmem:[%s299 + $0x10] sm:$0xf] %vm2466, %v2454
        %2472 = vst.msk [vmem:[%s299 + $0x14] sm:$0xf] %vm2466, %v2455
        %2473 = vst.msk [vmem:[%s299 + $0x18] sm:$0xf] %vm2466, %v2456
        %2474 = vst.msk [vmem:[%s299 + $0x1c] sm:$0xf] %vm2466, %v2457
        %s2475 = sand.u32 %s198, 1
        %s2476 = scalar_lea.sflag [#allocation6], %s2475
        %s2477 = sand.u32 %s198, 1
        %s2478 = smul.addr %s2477, 32
        %s2479 = scalar_lea.vmem [#allocation5], %s2478
        // Predicated region
        $region129: #{tpu_custom_call.1} parent=47 // pred_check
          %p2480 = pneg %p208
        $region130: #{tpu_custom_call.1} parent=47 // pred_check_branch
          %2482 = sbr.rel (%p2480) target = $region132
        $region131: #{tpu_custom_call.1} parent=47 // pred_region
          %s2483 = smul.u32 4, %s27
          %s2485 = ssub.s32 512, 512
          %2486 = vsyncadd %s2476, %s2485
          %s2487 = smul.addr %s2483, 2
          %s2488 = smul.addr %s26, 32
          %s2489 = sadd.s32 %s2487, %s2488
          %s2490 = smul.addr %s2489, 64
          %s2491 = scalar_lea.hbm %s8, %s2490
          %s2492 = sshll.u32 %s2479, 4
          %s2493 = int_to_ptr.vmem [resolvable:$true] %s2492
          %2498 = dma.vmem_to_hbm [thread:$0]  %s2493, 512, %s2491, %s2476, 64, 64, 4
        $region132: #{tpu_custom_call.1} parent=47 // pred_fallthru
          _
      $region48: #{tpu_custom_call.1} parent=5 // pred_fallthru
        _
      %p2499 = scmp.le.s32.totalorder 2, %s17
      // Predicated region
      $region133: #{tpu_custom_call.1} parent=5 // pred_check
        %p2500 = pneg %p2499
      $region134: #{tpu_custom_call.1} parent=5 // pred_check_branch
        %2502 = sbr.rel (%p2500) target = $region136
      $region135: #{tpu_custom_call.1} parent=5 // pred_region
        %s2503 = ssub.s32 %s17, 2
        // Predicated region
        $region137: #{tpu_custom_call.1} parent=135 // pred_check
          %p2504 = pneg %p214
        $region138: #{tpu_custom_call.1} parent=135 // pred_check_branch
          %2506 = sbr.rel (%p2504) target = $region140
        $region139: #{tpu_custom_call.1} parent=135 // pred_region
          %s2507 = sand.u32 %s199, 1
          %s2508 = scalar_lea.sflag [#allocation6], %s2507
          %s2509 = sand.u32 %s199, 1
          %s2510 = smul.addr %s2509, 32
          %s2511 = scalar_lea.vmem [#allocation5], %s2510
          %2512 = dma.done %s2508, 512
        $region140: #{tpu_custom_call.1} parent=135 // pred_fallthru
          _
      $region136: #{tpu_custom_call.1} parent=5 // pred_fallthru
        _
    $region6: #{tpu_custom_call.1} parent=1 // loop_footer
      %s21 = sadd.s32 1, %s17
    $region7: #{tpu_custom_call.1} parent=1 // loop_footer_branch
      %16 = sbr.rel target = $region3
    $region8: #{tpu_custom_call.1} parent=1 // loop_exit
      _
    %2513 = vsyncpa [#allocation6], 1
    %s2514 = scalar_lea.sflag [#allocation6], 1
    %2515 = vsyncpa %s2514, 1
  %2516 = vsyncmov [#allocation4]
  %s2517 = vpop.sfrf %2516
  %p2518 = scmp.eq.s32.totalorder %s2517, 0
  %p2519 = pneg %p2518
  %2521 = shalt.err (%p2519)
  %s2522 = scalar_lea.sflag [#allocation4], 1
  %2523 = vsyncmov %s2522
  %s2524 = vpop.sfrf %2523
  %p2525 = scmp.eq.s32.totalorder %s2524, 0
  %p2526 = pneg %p2525
  %2528 = shalt.err (%p2526)

</llo_original>
